<compile_context>
chip_gen: v7x
topology: tpu7x:2x2x1
jax: 0.10.0
libtpu: 0.0.40
codegen_flags: <defaults>
</compile_context>

<pallas_src>
import functools

import jax
import jax.numpy as jnp
from jax.experimental import pallas as pl
from jax.experimental.pallas import tpu as pltpu

# ---- model hyper-parameters (module defaults) -------------------------------
INPUT_IMG = 120          # conv1 in-channels
CHAR = 35                # sequence length L
K = 4                    # conv kernel size
C_MID = 9                # conv1/conv2 out-channels
CPAD = 16                # conv channels zero-padded to a sublane-tile multiple
L1 = CHAR - K + 1        # 32  (after conv1)
L2 = L1 - K + 1          # 29  (after conv2)   == (char - 8 + 2)
FC1_IN = C_MID * L2      # 261 (true fc1 fan-in)
FC1_PAD = CPAD * L1      # 512 (packed, zero-padded fc1 fan-in inside the kernel)
H1 = 512
H2 = 256
EPS = 1e-5
BATCH = 4                # B*L1 = 128 -> lane-dense packing

assert (L1 & (L1 - 1)) == 0, "BN2 valid-column mask uses a power-of-two trick"
assert CPAD % 8 == 0 and CPAD >= C_MID


def discriminator_kernel(flatten_mode,
                         pat_ref,                      # (K*C_in, B*L1) conv1 im2col, bf16
                         w1_ref, b1_ref, g1_ref, be1_ref,
                         w2_ref, b2_ref, g2_ref, be2_ref,
                         wfc1_ref, bfc1_ref,
                         wfc2_ref, bfc2_ref,
                         wfc3_ref, bfc3_ref,
                         out_ref,
                         fcin_ref):                    # VMEM scratch (B, FC1_PAD), scatter mode only
    Bn = out_ref.shape[0]
    bl1 = Bn * L1                                      # packed lane width (128 at B=4)

    # ---------------- conv1: one (CPAD, K*C_in) @ (K*C_in, B*L1) bf16 matmul --
    a1 = jnp.dot(w1_ref[...], pat_ref[...],
                 preferred_element_type=jnp.float32) + b1_ref[...]      # (16, B*L1) f32

    # ---------------- BatchNorm1d + ReLU (single pass, fused scale/shift) -----
    inv_n1 = 1.0 / bl1
    mean1 = jnp.sum(a1, axis=1, keepdims=True) * inv_n1                 # (16, 1)
    var1 = jnp.sum(a1 * a1, axis=1, keepdims=True) * inv_n1 - mean1 * mean1
    sc1 = g1_ref[...] * jax.lax.rsqrt(var1 + EPS)
    sh1 = be1_ref[...] - mean1 * sc1
    h1 = jnp.maximum(a1 * sc1 + sh1, 0.0)                               # (16, B*L1)

    # ---------------- conv2: ONE fused matmul over the 4 stacked taps ---------
    # h1s rows [k*CPAD + c] hold h1[c, j + k] (wrap-around only pollutes the
    # per-sample seam columns, which are masked out of BN2 and zero-weighted
    # in fc1).  w2_ref is pre-stacked host-side as (CPAD, K*CPAD).
    def shift_left(m, k):
        if k == 0:
            return m
        return jnp.concatenate([m[:, k:], m[:, :k]], axis=1)

    h1s = jnp.concatenate([shift_left(h1, k) for k in range(K)], axis=0)  # (K*CPAD, B*L1)
    a2 = jnp.dot(w2_ref[...], h1s,
                 preferred_element_type=jnp.float32) + b2_ref[...]      # (16, B*L1)

    # ---------------- BatchNorm1d + ReLU (masked stats over valid columns) ----
    col = jax.lax.broadcasted_iota(jnp.int32, (1, bl1), 1)
    valid = (col & (L1 - 1)) < L2                                       # t < L2 per sample
    a2v = jnp.where(valid, a2, 0.0)
    inv_n2 = 1.0 / (Bn * L2)
    mean2 = jnp.sum(a2v, axis=1, keepdims=True) * inv_n2
    var2 = jnp.sum(a2v * a2v, axis=1, keepdims=True) * inv_n2 - mean2 * mean2
    sc2 = g2_ref[...] * jax.lax.rsqrt(var2 + EPS)
    sh2 = be2_ref[...] - mean2 * sc2
    h2 = jnp.maximum(a2 * sc2 + sh2, 0.0)                               # (16, B*L1), finite everywhere

    # ---------------- flatten to (B, FC1_PAD) ---------------------------------
    # The fc1 weight is zero-padded host-side for the seam (t >= L2) and padded
    # (c >= 9) positions, so whichever packed layout we hand it is correct.
    if flatten_mode == "reshape":
        # Single relayout: (16, B*32) -> (B*32, 16) -> (B, 512); column = t*CPAD + c.
        x_fc = jnp.transpose(h2).reshape(Bn, FC1_PAD)
    else:
        # Fallback scatter (known-good lowering); column = c*L1 + t.
        fcin_ref[...] = jnp.zeros_like(fcin_ref)
        for b in range(Bn):
            for c in range(C_MID):
                fcin_ref[b:b + 1, c * L1:(c + 1) * L1] = h2[c:c + 1, b * L1:(b + 1) * L1]
        x_fc = fcin_ref[...]

    # ---------------- fc1(+ReLU) -> fc2(+LeakyReLU 0.2) -> fc3(+Sigmoid) ------
    x_fc = x_fc.astype(jnp.bfloat16)                                    # (B, 512)
    y1 = jnp.dot(x_fc, wfc1_ref[...],
                 preferred_element_type=jnp.float32) + bfc1_ref[...]    # (B, 512)
    y1 = jnp.maximum(y1, 0.0)

    y2 = jnp.dot(y1.astype(jnp.bfloat16), wfc2_ref[...],
                 preferred_element_type=jnp.float32) + bfc2_ref[...]    # (B, 256)
    y2 = jnp.where(y2 > 0, y2, 0.2 * y2)                                # LeakyReLU(0.2)

    # fc3 (N=1): VPU multiply + lane reduction instead of an MXU pass.
    y3 = jnp.sum(y2 * wfc3_ref[...], axis=1, keepdims=True) + bfc3_ref[...]  # (B, 1)
    out_ref[...] = jax.nn.sigmoid(y3)


# ---------------------------------------------------------------------------
# Host-side (one-time) parameter layout preparation
# ---------------------------------------------------------------------------
def prepare_params(p, flatten_mode):
    cpad = CPAD - C_MID
    bf16 = jnp.bfloat16

    # conv1 weight -> (CPAD, K*C_in), column = k*C_in + c ; bf16.
    w1m = jnp.transpose(p['w1'], (0, 2, 1)).reshape(C_MID, K * INPUT_IMG)
    w1m = jnp.pad(w1m, ((0, cpad), (0, 0))).astype(bf16)
    b1 = jnp.pad(p['b1'], (0, cpad)).reshape(CPAD, 1)
    g1 = jnp.pad(p['g1'], (0, cpad)).reshape(CPAD, 1)
    be1 = jnp.pad(p['be1'], (0, cpad)).reshape(CPAD, 1)

    # conv2 weight pre-stacked over taps -> (CPAD, K*CPAD), column = k*CPAD + c.
    w2p = jnp.pad(p['w2'], ((0, cpad), (0, cpad), (0, 0)))              # (16,16,4) [o,c,k]
    w2s = jnp.transpose(w2p, (0, 2, 1)).reshape(CPAD, K * CPAD)         # [o, k*16+c]
    b2 = jnp.pad(p['b2'], (0, cpad)).reshape(CPAD, 1)
    g2 = jnp.pad(p['g2'], (0, cpad)).reshape(CPAD, 1)
    be2 = jnp.pad(p['be2'], (0, cpad)).reshape(CPAD, 1)

    # fc1 weight zero-padded to the packed flatten layout (seam cols & padded
    # channels get zero rows), bf16.
    w3 = p['fc1_w'].reshape(H1, C_MID, L2)                              # [n, c, t]
    w3 = jnp.pad(w3, ((0, 0), (0, cpad), (0, L1 - L2)))                 # (512, 16, 32)
    if flatten_mode == "reshape":
        wfc1 = jnp.transpose(w3, (2, 1, 0)).reshape(L1 * CPAD, H1)      # row = t*CPAD + c
    else:
        wfc1 = jnp.transpose(w3, (1, 2, 0)).reshape(CPAD * L1, H1)      # row = c*L1 + t
    wfc1 = wfc1.astype(bf16)
    bfc1 = p['fc1_b'].reshape(1, H1)

    wfc2 = p['fc2_w'].T.astype(bf16)                                    # (512, 256)
    bfc2 = p['fc2_b'].reshape(1, H2)
    wfc3 = p['fc3_w'].reshape(1, H2)                                    # row vector for VPU fc3
    bfc3 = p['fc3_b'].reshape(1, 1)

    return (w1m, b1, g1, be1, w2s, b2, g2, be2,
            wfc1, bfc1, wfc2, bfc2, wfc3, bfc3)


def make_forward(p, flatten_mode="reshape"):
    """Returns a jitted x -> validity function; all weight prep done once here."""
    weights = prepare_params(p, flatten_mode)
    kernel = functools.partial(discriminator_kernel, flatten_mode)
    vspec = pl.BlockSpec(memory_space=pltpu.MemorySpace.VMEM)

    @jax.jit
    def fwd(x):
        Bn = x.shape[0]
        # conv1 im2col patches, batch packed into lanes, bf16:
        #   pat[k*C_in + c, b*L1 + t] = x[b, c, t + k]
        pat = jnp.stack([x[:, :, k:k + L1] for k in range(K)], axis=0)   # (K,B,C,L1)
        pat = jnp.transpose(pat, (0, 2, 1, 3)).reshape(K * INPUT_IMG, Bn * L1)
        pat = pat.astype(jnp.bfloat16)

        return pl.pallas_call(
            kernel,
            out_shape=jax.ShapeDtypeStruct((Bn, 1), jnp.float32),
            in_specs=[vspec] * 15,
            out_specs=vspec,
            scratch_shapes=[pltpu.VMEM((Bn, FC1_PAD), jnp.float32)],
        )(pat, *weights)

    return fwd


# ---------------------------------------------------------------------------
# Deterministic parameter init (PyTorch layouts) and pure-JAX reference
# ---------------------------------------------------------------------------
def init_params(key):
    ks = jax.random.split(key, 10)

    def uni(k, shape, fan_in):
        bound = 1.0 / (fan_in ** 0.5)
        return jax.random.uniform(k, shape, jnp.float32, -bound, bound)

    return {
        'w1': uni(ks[0], (C_MID, INPUT_IMG, K), INPUT_IMG * K),   # Conv1d weight (O,C,K)
        'b1': uni(ks[1], (C_MID,), INPUT_IMG * K),
        'w2': uni(ks[2], (C_MID, C_MID, K), C_MID * K),
        'b2': uni(ks[3], (C_MID,), C_MID * K),
        'fc1_w': uni(ks[4], (H1, FC1_IN), FC1_IN),                # Linear weight (out,in)
        'fc1_b': uni(ks[5], (H1,), FC1_IN),
        'fc2_w': uni(ks[6], (H2, H1), H1),
        'fc2_b': uni(ks[7], (H2,), H1),
        'fc3_w': uni(ks[8], (1, H2), H2),
        'fc3_b': uni(ks[9], (1,), H2),
        'g1': jnp.ones((C_MID,), jnp.float32),
        'be1': jnp.zeros((C_MID,), jnp.float32),
        'g2': jnp.ones((C_MID,), jnp.float32),
        'be2': jnp.zeros((C_MID,), jnp.float32),
    }


def reference_forward(x, p):
    """Pure-JAX reference mirroring the PyTorch forward (training-mode BN)."""
    def conv1d(xin, w, b):
        kk = w.shape[2]
        lo = xin.shape[2] - kk + 1
        acc = jnp.zeros((xin.shape[0], w.shape[0], lo), jnp.float32)
        for k in range(kk):
            acc = acc + jnp.einsum('bct,oc->bot', xin[:, :, k:k + lo], w[:, :, k])
        return acc + b[None, :, None]

    def bn_relu(xin, g, be):
        m = xin.mean(axis=(0, 2), keepdims=True)
        v = ((xin - m) ** 2).mean(axis=(0, 2), keepdims=True)
        return jnp.maximum(g[None, :, None] * (xin - m) * jax.lax.rsqrt(v + EPS)
                           + be[None, :, None], 0.0)

    h = bn_relu(conv1d(x, p['w1'], p['b1']), p['g1'], p['be1'])
    h = bn_relu(conv1d(h, p['w2'], p['b2']), p['g2'], p['be2'])
    h = h.reshape(x.shape[0], -1)                           # == flatten().view(B,-1)
    h = jnp.maximum(h @ p['fc1_w'].T + p['fc1_b'], 0.0)
    h = h @ p['fc2_w'].T + p['fc2_b']
    h = jnp.where(h > 0, h, 0.2 * h)
    h = h @ p['fc3_w'].T + p['fc3_b']
    return jax.nn.sigmoid(h)


if __name__ == "__main__":
    key = jax.random.PRNGKey(0)
    kx, kp = jax.random.split(key)
    x = jax.random.normal(kx, (BATCH, INPUT_IMG, CHAR), jnp.float32)
    params = init_params(kp)

    # Primary path: single transpose+reshape flatten (per perf review).
    # Fallback: scatter-based flatten (known-good lowering) if the relayout
    # path is rejected by the local Mosaic toolchain.
    try:
        fwd = make_forward(params, flatten_mode="reshape")
        out = jax.block_until_ready(fwd(x))
    except Exception:
        fwd = make_forward(params, flatten_mode="scatter")
        out = jax.block_until_ready(fwd(x))

    ref = reference_forward(x, params)
    assert out.shape == (BATCH, 1), out.shape
    # conv1 patches / fc1 / fc2 run bf16 x bf16 on the MXU (intentional, per
    # perf review), so the comparison against the f32 reference uses 1e-2.
    err = float(jnp.max(jnp.abs(out - ref)))
    assert err < 1e-2, f"max abs error vs reference: {err}"
    print("KERNEL_OK")
</pallas_src>

<mosaic_0001>
module attributes {stable_mosaic.version = 11 : i64} {
  func.func @discriminator_kernel(%arg0: memref<480x128xbf16, #tpu.memory_space<vmem>>, %arg1: memref<16x480xbf16, #tpu.memory_space<vmem>>, %arg2: memref<16x1xf32, #tpu.memory_space<vmem>>, %arg3: memref<16x1xf32, #tpu.memory_space<vmem>>, %arg4: memref<16x1xf32, #tpu.memory_space<vmem>>, %arg5: memref<16x64xf32, #tpu.memory_space<vmem>>, %arg6: memref<16x1xf32, #tpu.memory_space<vmem>>, %arg7: memref<16x1xf32, #tpu.memory_space<vmem>>, %arg8: memref<16x1xf32, #tpu.memory_space<vmem>>, %arg9: memref<512x512xbf16, #tpu.memory_space<vmem>>, %arg10: memref<1x512xf32, #tpu.memory_space<vmem>>, %arg11: memref<512x256xbf16, #tpu.memory_space<vmem>>, %arg12: memref<1x256xf32, #tpu.memory_space<vmem>>, %arg13: memref<1x256xf32, #tpu.memory_space<vmem>>, %arg14: memref<1x1xf32, #tpu.memory_space<vmem>>, %arg15: memref<4x1xf32, #tpu.memory_space<vmem>>, %arg16: memref<4x512xf32, #tpu.memory_space<vmem>>) attributes {dimension_semantics = [], scalar_prefetch = 0 : i64, scratch_operands = 1 : i64, tpu.core_type = #tpu.core_type<tc>} {
    %c0 = arith.constant 0 : index
    %c0_0 = arith.constant 0 : index
    %0 = vector.load %arg1[%c0, %c0_0] : memref<16x480xbf16, #tpu.memory_space<vmem>>, vector<16x480xbf16>
    %c0_1 = arith.constant 0 : index
    %c0_2 = arith.constant 0 : index
    %1 = vector.load %arg0[%c0_1, %c0_2] : memref<480x128xbf16, #tpu.memory_space<vmem>>, vector<480x128xbf16>
    %cst = arith.constant dense<0.000000e+00> : vector<16x128xf32>
    %2 = tpu.matmul %0, %1, %cst {dimension_numbers = #tpu.dot_dimension_numbers<[1], [0], [0], [1], [0, 0, 1, 1], [], []>} : vector<16x480xbf16>, vector<480x128xbf16>, vector<16x128xf32> -> vector<16x128xf32>
    %c0_3 = arith.constant 0 : index
    %c0_4 = arith.constant 0 : index
    %3 = vector.load %arg2[%c0_3, %c0_4] : memref<16x1xf32, #tpu.memory_space<vmem>>, vector<16x1xf32>
    %4 = vector.broadcast %3 : vector<16x1xf32> to vector<16x128xf32>
    %5 = arith.addf %2, %4 : vector<16x128xf32>
    %cst_5 = arith.constant dense<0.000000e+00> : vector<16xf32>
    %6 = vector.multi_reduction <add>, %5, %cst_5 [1] : vector<16x128xf32> to vector<16xf32>
    %7 = vector.shape_cast %6 : vector<16xf32> to vector<16x1xf32>
    %cst_6 = arith.constant 7.812500e-03 : f32
    %8 = vector.broadcast %cst_6 : f32 to vector<16x1xf32>
    %9 = arith.mulf %7, %8 : vector<16x1xf32>
    %10 = arith.mulf %5, %5 : vector<16x128xf32>
    %cst_7 = arith.constant dense<0.000000e+00> : vector<16xf32>
    %11 = vector.multi_reduction <add>, %10, %cst_7 [1] : vector<16x128xf32> to vector<16xf32>
    %12 = vector.shape_cast %11 : vector<16xf32> to vector<16x1xf32>
    %cst_8 = arith.constant 7.812500e-03 : f32
    %13 = vector.broadcast %cst_8 : f32 to vector<16x1xf32>
    %14 = arith.mulf %12, %13 : vector<16x1xf32>
    %15 = arith.mulf %9, %9 : vector<16x1xf32>
    %16 = arith.subf %14, %15 : vector<16x1xf32>
    %c0_9 = arith.constant 0 : index
    %c0_10 = arith.constant 0 : index
    %17 = vector.load %arg3[%c0_9, %c0_10] : memref<16x1xf32, #tpu.memory_space<vmem>>, vector<16x1xf32>
    %cst_11 = arith.constant 9.99999974E-6 : f32
    %18 = vector.broadcast %cst_11 : f32 to vector<16x1xf32>
    %19 = arith.addf %16, %18 : vector<16x1xf32>
    %20 = math.rsqrt %19 : vector<16x1xf32>
    %21 = arith.mulf %17, %20 : vector<16x1xf32>
    %c0_12 = arith.constant 0 : index
    %c0_13 = arith.constant 0 : index
    %22 = vector.load %arg4[%c0_12, %c0_13] : memref<16x1xf32, #tpu.memory_space<vmem>>, vector<16x1xf32>
    %23 = arith.mulf %9, %21 : vector<16x1xf32>
    %24 = arith.subf %22, %23 : vector<16x1xf32>
    %25 = vector.broadcast %21 : vector<16x1xf32> to vector<16x128xf32>
    %26 = arith.mulf %5, %25 : vector<16x128xf32>
    %27 = vector.broadcast %24 : vector<16x1xf32> to vector<16x128xf32>
    %28 = arith.addf %26, %27 : vector<16x128xf32>
    %cst_14 = arith.constant 0.000000e+00 : f32
    %29 = vector.broadcast %cst_14 : f32 to vector<16x128xf32>
    %30 = arith.maximumf %28, %29 : vector<16x128xf32>
    %31 = vector.extract_strided_slice %30 {offsets = [0, 1], sizes = [16, 127], strides = [1, 1]} : vector<16x128xf32> to vector<16x127xf32>
    %32 = vector.extract_strided_slice %30 {offsets = [0, 0], sizes = [16, 1], strides = [1, 1]} : vector<16x128xf32> to vector<16x1xf32>
    %33 = tpu.concatenate %31, %32 in 1 : vector<16x127xf32>, vector<16x1xf32> -> vector<16x128xf32>
    %34 = vector.extract_strided_slice %30 {offsets = [0, 2], sizes = [16, 126], strides = [1, 1]} : vector<16x128xf32> to vector<16x126xf32>
    %35 = vector.extract_strided_slice %30 {offsets = [0, 0], sizes = [16, 2], strides = [1, 1]} : vector<16x128xf32> to vector<16x2xf32>
    %36 = tpu.concatenate %34, %35 in 1 : vector<16x126xf32>, vector<16x2xf32> -> vector<16x128xf32>
    %37 = vector.extract_strided_slice %30 {offsets = [0, 3], sizes = [16, 125], strides = [1, 1]} : vector<16x128xf32> to vector<16x125xf32>
    %38 = vector.extract_strided_slice %30 {offsets = [0, 0], sizes = [16, 3], strides = [1, 1]} : vector<16x128xf32> to vector<16x3xf32>
    %39 = tpu.concatenate %37, %38 in 1 : vector<16x125xf32>, vector<16x3xf32> -> vector<16x128xf32>
    %40 = tpu.concatenate %30, %33, %36, %39 in 0 : vector<16x128xf32>, vector<16x128xf32>, vector<16x128xf32>, vector<16x128xf32> -> vector<64x128xf32>
    %c0_15 = arith.constant 0 : index
    %c0_16 = arith.constant 0 : index
    %41 = vector.load %arg5[%c0_15, %c0_16] : memref<16x64xf32, #tpu.memory_space<vmem>>, vector<16x64xf32>
    %cst_17 = arith.constant dense<0.000000e+00> : vector<16x128xf32>
    %42 = tpu.matmul %41, %40, %cst_17 {dimension_numbers = #tpu.dot_dimension_numbers<[1], [0], [0], [1], [0, 0, 1, 1], [], []>} : vector<16x64xf32>, vector<64x128xf32>, vector<16x128xf32> -> vector<16x128xf32>
    %c0_18 = arith.constant 0 : index
    %c0_19 = arith.constant 0 : index
    %43 = vector.load %arg6[%c0_18, %c0_19] : memref<16x1xf32, #tpu.memory_space<vmem>>, vector<16x1xf32>
    %44 = vector.broadcast %43 : vector<16x1xf32> to vector<16x128xf32>
    %45 = arith.addf %42, %44 : vector<16x128xf32>
    %46 = tpu.iota {dimensions = array<i32: 1>} : vector<1x128xi32>
    %c31_i32 = arith.constant 31 : i32
    %47 = vector.broadcast %c31_i32 : i32 to vector<1x128xi32>
    %48 = arith.andi %46, %47 : vector<1x128xi32>
    %c29_i32 = arith.constant 29 : i32
    %49 = vector.broadcast %c29_i32 : i32 to vector<1x128xi32>
    %50 = arith.cmpi slt, %48, %49 : vector<1x128xi32>
    %cst_20 = arith.constant 0.000000e+00 : f32
    %51 = vector.shape_cast %50 : vector<1x128xi1> to vector<1x128xi1>
    %52 = vector.broadcast %51 : vector<1x128xi1> to vector<16x128xi1>
    %53 = vector.broadcast %cst_20 : f32 to vector<16x128xf32>
    %54 = arith.select %52, %45, %53 : vector<16x128xi1>, vector<16x128xf32>
    %cst_21 = arith.constant dense<0.000000e+00> : vector<16xf32>
    %55 = vector.multi_reduction <add>, %54, %cst_21 [1] : vector<16x128xf32> to vector<16xf32>
    %56 = vector.shape_cast %55 : vector<16xf32> to vector<16x1xf32>
    %cst_22 = arith.constant 8.620690e-03 : f32
    %57 = vector.broadcast %cst_22 : f32 to vector<16x1xf32>
    %58 = arith.mulf %56, %57 : vector<16x1xf32>
    %59 = arith.mulf %54, %54 : vector<16x128xf32>
    %cst_23 = arith.constant dense<0.000000e+00> : vector<16xf32>
    %60 = vector.multi_reduction <add>, %59, %cst_23 [1] : vector<16x128xf32> to vector<16xf32>
    %61 = vector.shape_cast %60 : vector<16xf32> to vector<16x1xf32>
    %cst_24 = arith.constant 8.620690e-03 : f32
    %62 = vector.broadcast %cst_24 : f32 to vector<16x1xf32>
    %63 = arith.mulf %61, %62 : vector<16x1xf32>
    %64 = arith.mulf %58, %58 : vector<16x1xf32>
    %65 = arith.subf %63, %64 : vector<16x1xf32>
    %c0_25 = arith.constant 0 : index
    %c0_26 = arith.constant 0 : index
    %66 = vector.load %arg7[%c0_25, %c0_26] : memref<16x1xf32, #tpu.memory_space<vmem>>, vector<16x1xf32>
    %cst_27 = arith.constant 9.99999974E-6 : f32
    %67 = vector.broadcast %cst_27 : f32 to vector<16x1xf32>
    %68 = arith.addf %65, %67 : vector<16x1xf32>
    %69 = math.rsqrt %68 : vector<16x1xf32>
    %70 = arith.mulf %66, %69 : vector<16x1xf32>
    %c0_28 = arith.constant 0 : index
    %c0_29 = arith.constant 0 : index
    %71 = vector.load %arg8[%c0_28, %c0_29] : memref<16x1xf32, #tpu.memory_space<vmem>>, vector<16x1xf32>
    %72 = arith.mulf %58, %70 : vector<16x1xf32>
    %73 = arith.subf %71, %72 : vector<16x1xf32>
    %74 = vector.broadcast %70 : vector<16x1xf32> to vector<16x128xf32>
    %75 = arith.mulf %45, %74 : vector<16x128xf32>
    %76 = vector.broadcast %73 : vector<16x1xf32> to vector<16x128xf32>
    %77 = arith.addf %75, %76 : vector<16x128xf32>
    %cst_30 = arith.constant 0.000000e+00 : f32
    %78 = vector.broadcast %cst_30 : f32 to vector<16x128xf32>
    %79 = arith.maximumf %77, %78 : vector<16x128xf32>
    %80 = tpu.transpose %79, [1, 0] : vector<16x128xf32> -> vector<128x16xf32>
    %81 = vector.shape_cast %80 : vector<128x16xf32> to vector<4x512xf32>
    %82 = arith.truncf %81 : vector<4x512xf32> to vector<4x512xbf16>
    %c0_31 = arith.constant 0 : index
    %c0_32 = arith.constant 0 : index
    %83 = vector.load %arg9[%c0_31, %c0_32] : memref<512x512xbf16, #tpu.memory_space<vmem>>, vector<512x512xbf16>
    %cst_33 = arith.constant dense<0.000000e+00> : vector<4x512xf32>
    %84 = tpu.matmul %82, %83, %cst_33 {dimension_numbers = #tpu.dot_dimension_numbers<[1], [0], [0], [1], [0, 0, 1, 1], [], []>} : vector<4x512xbf16>, vector<512x512xbf16>, vector<4x512xf32> -> vector<4x512xf32>
    %c0_34 = arith.constant 0 : index
    %c0_35 = arith.constant 0 : index
    %85 = vector.load %arg10[%c0_34, %c0_35] : memref<1x512xf32, #tpu.memory_space<vmem>>, vector<1x512xf32>
    %86 = vector.broadcast %85 : vector<1x512xf32> to vector<4x512xf32>
    %87 = arith.addf %84, %86 : vector<4x512xf32>
    %cst_36 = arith.constant 0.000000e+00 : f32
    %88 = vector.broadcast %cst_36 : f32 to vector<4x512xf32>
    %89 = arith.maximumf %87, %88 : vector<4x512xf32>
    %90 = arith.truncf %89 : vector<4x512xf32> to vector<4x512xbf16>
    %c0_37 = arith.constant 0 : index
    %c0_38 = arith.constant 0 : index
    %91 = vector.load %arg11[%c0_37, %c0_38] : memref<512x256xbf16, #tpu.memory_space<vmem>>, vector<512x256xbf16>
    %cst_39 = arith.constant dense<0.000000e+00> : vector<4x256xf32>
    %92 = tpu.matmul %90, %91, %cst_39 {dimension_numbers = #tpu.dot_dimension_numbers<[1], [0], [0], [1], [0, 0, 1, 1], [], []>} : vector<4x512xbf16>, vector<512x256xbf16>, vector<4x256xf32> -> vector<4x256xf32>
    %c0_40 = arith.constant 0 : index
    %c0_41 = arith.constant 0 : index
    %93 = vector.load %arg12[%c0_40, %c0_41] : memref<1x256xf32, #tpu.memory_space<vmem>>, vector<1x256xf32>
    %94 = vector.broadcast %93 : vector<1x256xf32> to vector<4x256xf32>
    %95 = arith.addf %92, %94 : vector<4x256xf32>
    %cst_42 = arith.constant 0.000000e+00 : f32
    %96 = vector.broadcast %cst_42 : f32 to vector<4x256xf32>
    %97 = arith.cmpf ogt, %95, %96 : vector<4x256xf32>
    %cst_43 = arith.constant 2.000000e-01 : f32
    %98 = vector.broadcast %cst_43 : f32 to vector<4x256xf32>
    %99 = arith.mulf %98, %95 : vector<4x256xf32>
    %100 = arith.select %97, %95, %99 : vector<4x256xi1>, vector<4x256xf32>
    %c0_44 = arith.constant 0 : index
    %c0_45 = arith.constant 0 : index
    %101 = vector.load %arg13[%c0_44, %c0_45] : memref<1x256xf32, #tpu.memory_space<vmem>>, vector<1x256xf32>
    %102 = vector.broadcast %101 : vector<1x256xf32> to vector<4x256xf32>
    %103 = arith.mulf %100, %102 : vector<4x256xf32>
    %cst_46 = arith.constant dense<0.000000e+00> : vector<4xf32>
    %104 = vector.multi_reduction <add>, %103, %cst_46 [1] : vector<4x256xf32> to vector<4xf32>
    %105 = vector.shape_cast %104 : vector<4xf32> to vector<4x1xf32>
    %c0_47 = arith.constant 0 : index
    %c0_48 = arith.constant 0 : index
    %106 = vector.load %arg14[%c0_47, %c0_48] : memref<1x1xf32, #tpu.memory_space<vmem>>, vector<1x1xf32>
    %107 = vector.broadcast %106 : vector<1x1xf32> to vector<4x1xf32>
    %108 = arith.addf %105, %107 : vector<4x1xf32>
    %109 = arith.negf %108 : vector<4x1xf32>
    %110 = math.exp %109 : vector<4x1xf32>
    %cst_49 = arith.constant 1.000000e+00 : f32
    %111 = vector.broadcast %cst_49 : f32 to vector<4x1xf32>
    %112 = arith.addf %111, %110 : vector<4x1xf32>
    %113 = arith.divf %111, %112 : vector<4x1xf32>
    %c0_50 = arith.constant 0 : index
    %c0_51 = arith.constant 0 : index
    %114 = vector.load %arg15[%c0_50, %c0_51] : memref<4x1xf32, #tpu.memory_space<vmem>>, vector<4x1xf32>
    tpu.vector_store %arg15[%c0_50, %c0_51], %113 {strides = array<i32>} : memref<4x1xf32, #tpu.memory_space<vmem>>, vector<4x1xf32>,
    return
  }
}

module attributes {stable_mosaic.version = 11 : i64} {
  func.func @discriminator_kernel(%arg0: memref<480x128xbf16, #tpu.memory_space<vmem>>, %arg1: memref<16x480xbf16, #tpu.memory_space<vmem>>, %arg2: memref<16x1xf32, #tpu.memory_space<vmem>>, %arg3: memref<16x1xf32, #tpu.memory_space<vmem>>, %arg4: memref<16x1xf32, #tpu.memory_space<vmem>>, %arg5: memref<16x64xf32, #tpu.memory_space<vmem>>, %arg6: memref<16x1xf32, #tpu.memory_space<vmem>>, %arg7: memref<16x1xf32, #tpu.memory_space<vmem>>, %arg8: memref<16x1xf32, #tpu.memory_space<vmem>>, %arg9: memref<512x512xbf16, #tpu.memory_space<vmem>>, %arg10: memref<1x512xf32, #tpu.memory_space<vmem>>, %arg11: memref<512x256xbf16, #tpu.memory_space<vmem>>, %arg12: memref<1x256xf32, #tpu.memory_space<vmem>>, %arg13: memref<1x256xf32, #tpu.memory_space<vmem>>, %arg14: memref<1x1xf32, #tpu.memory_space<vmem>>, %arg15: memref<4x1xf32, #tpu.memory_space<vmem>>, %arg16: memref<4x512xf32, #tpu.memory_space<vmem>>) attributes {dimension_semantics = [], scalar_prefetch = 0 : i64, scratch_operands = 1 : i64, tpu.core_type = #tpu.core_type<tc>} {
    %c0 = arith.constant 0 : index
    %c0_0 = arith.constant 0 : index
    %0 = vector.load %arg1[%c0, %c0_0] : memref<16x480xbf16, #tpu.memory_space<vmem>>, vector<16x480xbf16>
    %c0_1 = arith.constant 0 : index
    %c0_2 = arith.constant 0 : index
    %1 = vector.load %arg0[%c0_1, %c0_2] : memref<480x128xbf16, #tpu.memory_space<vmem>>, vector<480x128xbf16>
    %cst = arith.constant dense<0.000000e+00> : vector<16x128xf32>
    %2 = tpu.matmul %0, %1, %cst {dimension_numbers = #tpu.dot_dimension_numbers<[1], [0], [0], [1], [0, 0, 1, 1], [], []>} : vector<16x480xbf16>, vector<480x128xbf16>, vector<16x128xf32> -> vector<16x128xf32>
    %c0_3 = arith.constant 0 : index
    %c0_4 = arith.constant 0 : index
    %3 = vector.load %arg2[%c0_3, %c0_4] : memref<16x1xf32, #tpu.memory_space<vmem>>, vector<16x1xf32>
    %4 = vector.broadcast %3 : vector<16x1xf32> to vector<16x128xf32>
    %5 = arith.addf %2, %4 : vector<16x128xf32>
    %cst_5 = arith.constant dense<0.000000e+00> : vector<16xf32>
    %6 = vector.multi_reduction <add>, %5, %cst_5 [1] : vector<16x128xf32> to vector<16xf32>
    %7 = vector.shape_cast %6 : vector<16xf32> to vector<16x1xf32>
    %cst_6 = arith.constant 7.812500e-03 : f32
    %8 = vector.broadcast %cst_6 : f32 to vector<16x1xf32>
    %9 = arith.mulf %7, %8 : vector<16x1xf32>
    %10 = arith.mulf %5, %5 : vector<16x128xf32>
    %cst_7 = arith.constant dense<0.000000e+00> : vector<16xf32>
    %11 = vector.multi_reduction <add>, %10, %cst_7 [1] : vector<16x128xf32> to vector<16xf32>
    %12 = vector.shape_cast %11 : vector<16xf32> to vector<16x1xf32>
    %cst_8 = arith.constant 7.812500e-03 : f32
    %13 = vector.broadcast %cst_8 : f32 to vector<16x1xf32>
    %14 = arith.mulf %12, %13 : vector<16x1xf32>
    %15 = arith.mulf %9, %9 : vector<16x1xf32>
    %16 = arith.subf %14, %15 : vector<16x1xf32>
    %c0_9 = arith.constant 0 : index
    %c0_10 = arith.constant 0 : index
    %17 = vector.load %arg3[%c0_9, %c0_10] : memref<16x1xf32, #tpu.memory_space<vmem>>, vector<16x1xf32>
    %cst_11 = arith.constant 9.99999974E-6 : f32
    %18 = vector.broadcast %cst_11 : f32 to vector<16x1xf32>
    %19 = arith.addf %16, %18 : vector<16x1xf32>
    %20 = math.rsqrt %19 : vector<16x1xf32>
    %21 = arith.mulf %17, %20 : vector<16x1xf32>
    %c0_12 = arith.constant 0 : index
    %c0_13 = arith.constant 0 : index
    %22 = vector.load %arg4[%c0_12, %c0_13] : memref<16x1xf32, #tpu.memory_space<vmem>>, vector<16x1xf32>
    %23 = arith.mulf %9, %21 : vector<16x1xf32>
    %24 = arith.subf %22, %23 : vector<16x1xf32>
    %25 = vector.broadcast %21 : vector<16x1xf32> to vector<16x128xf32>
    %26 = arith.mulf %5, %25 : vector<16x128xf32>
    %27 = vector.broadcast %24 : vector<16x1xf32> to vector<16x128xf32>
    %28 = arith.addf %26, %27 : vector<16x128xf32>
    %cst_14 = arith.constant 0.000000e+00 : f32
    %29 = vector.broadcast %cst_14 : f32 to vector<16x128xf32>
    %30 = arith.maximumf %28, %29 : vector<16x128xf32>
    %31 = vector.extract_strided_slice %30 {offsets = [0, 1], sizes = [16, 127], strides = [1, 1]} : vector<16x128xf32> to vector<16x127xf32>
    %32 = vector.extract_strided_slice %30 {offsets = [0, 0], sizes = [16, 1], strides = [1, 1]} : vector<16x128xf32> to vector<16x1xf32>
    %33 = tpu.concatenate %31, %32 in 1 : vector<16x127xf32>, vector<16x1xf32> -> vector<16x128xf32>
    %34 = vector.extract_strided_slice %30 {offsets = [0, 2], sizes = [16, 126], strides = [1, 1]} : vector<16x128xf32> to vector<16x126xf32>
    %35 = vector.extract_strided_slice %30 {offsets = [0, 0], sizes = [16, 2], strides = [1, 1]} : vector<16x128xf32> to vector<16x2xf32>
    %36 = tpu.concatenate %34, %35 in 1 : vector<16x126xf32>, vector<16x2xf32> -> vector<16x128xf32>
    %37 = vector.extract_strided_slice %30 {offsets = [0, 3], sizes = [16, 125], strides = [1, 1]} : vector<16x128xf32> to vector<16x125xf32>
    %38 = vector.extract_strided_slice %30 {offsets = [0, 0], sizes = [16, 3], strides = [1, 1]} : vector<16x128xf32> to vector<16x3xf32>
    %39 = tpu.concatenate %37, %38 in 1 : vector<16x125xf32>, vector<16x3xf32> -> vector<16x128xf32>
    %40 = tpu.concatenate %30, %33, %36, %39 in 0 : vector<16x128xf32>, vector<16x128xf32>, vector<16x128xf32>, vector<16x128xf32> -> vector<64x128xf32>
    %c0_15 = arith.constant 0 : index
    %c0_16 = arith.constant 0 : index
    %41 = vector.load %arg5[%c0_15, %c0_16] : memref<16x64xf32, #tpu.memory_space<vmem>>, vector<16x64xf32>
    %cst_17 = arith.constant dense<0.000000e+00> : vector<16x128xf32>
    %42 = tpu.matmul %41, %40, %cst_17 {dimension_numbers = #tpu.dot_dimension_numbers<[1], [0], [0], [1], [0, 0, 1, 1], [], []>} : vector<16x64xf32>, vector<64x128xf32>, vector<16x128xf32> -> vector<16x128xf32>
    %c0_18 = arith.constant 0 : index
    %c0_19 = arith.constant 0 : index
    %43 = vector.load %arg6[%c0_18, %c0_19] : memref<16x1xf32, #tpu.memory_space<vmem>>, vector<16x1xf32>
    %44 = vector.broadcast %43 : vector<16x1xf32> to vector<16x128xf32>
    %45 = arith.addf %42, %44 : vector<16x128xf32>
    %46 = tpu.iota {dimensions = array<i32: 1>} : vector<1x128xi32>
    %c31_i32 = arith.constant 31 : i32
    %47 = vector.broadcast %c31_i32 : i32 to vector<1x128xi32>
    %48 = arith.andi %46, %47 : vector<1x128xi32>
    %c29_i32 = arith.constant 29 : i32
    %49 = vector.broadcast %c29_i32 : i32 to vector<1x128xi32>
    %50 = arith.cmpi slt, %48, %49 : vector<1x128xi32>
    %cst_20 = arith.constant 0.000000e+00 : f32
    %51 = vector.shape_cast %50 : vector<1x128xi1> to vector<1x128xi1>
    %52 = vector.broadcast %51 : vector<1x128xi1> to vector<16x128xi1>
    %53 = vector.broadcast %cst_20 : f32 to vector<16x128xf32>
    %54 = arith.select %52, %45, %53 : vector<16x128xi1>, vector<16x128xf32>
    %cst_21 = arith.constant dense<0.000000e+00> : vector<16xf32>
    %55 = vector.multi_reduction <add>, %54, %cst_21 [1] : vector<16x128xf32> to vector<16xf32>
    %56 = vector.shape_cast %55 : vector<16xf32> to vector<16x1xf32>
    %cst_22 = arith.constant 8.620690e-03 : f32
    %57 = vector.broadcast %cst_22 : f32 to vector<16x1xf32>
    %58 = arith.mulf %56, %57 : vector<16x1xf32>
    %59 = arith.mulf %54, %54 : vector<16x128xf32>
    %cst_23 = arith.constant dense<0.000000e+00> : vector<16xf32>
    %60 = vector.multi_reduction <add>, %59, %cst_23 [1] : vector<16x128xf32> to vector<16xf32>
    %61 = vector.shape_cast %60 : vector<16xf32> to vector<16x1xf32>
    %cst_24 = arith.constant 8.620690e-03 : f32
    %62 = vector.broadcast %cst_24 : f32 to vector<16x1xf32>
    %63 = arith.mulf %61, %62 : vector<16x1xf32>
    %64 = arith.mulf %58, %58 : vector<16x1xf32>
    %65 = arith.subf %63, %64 : vector<16x1xf32>
    %c0_25 = arith.constant 0 : index
    %c0_26 = arith.constant 0 : index
    %66 = vector.load %arg7[%c0_25, %c0_26] : memref<16x1xf32, #tpu.memory_space<vmem>>, vector<16x1xf32>
    %cst_27 = arith.constant 9.99999974E-6 : f32
    %67 = vector.broadcast %cst_27 : f32 to vector<16x1xf32>
    %68 = arith.addf %65, %67 : vector<16x1xf32>
    %69 = math.rsqrt %68 : vector<16x1xf32>
    %70 = arith.mulf %66, %69 : vector<16x1xf32>
    %c0_28 = arith.constant 0 : index
    %c0_29 = arith.constant 0 : index
    %71 = vector.load %arg8[%c0_28, %c0_29] : memref<16x1xf32, #tpu.memory_space<vmem>>, vector<16x1xf32>
    %72 = arith.mulf %58, %70 : vector<16x1xf32>
    %73 = arith.subf %71, %72 : vector<16x1xf32>
    %74 = vector.broadcast %70 : vector<16x1xf32> to vector<16x128xf32>
    %75 = arith.mulf %45, %74 : vector<16x128xf32>
    %76 = vector.broadcast %73 : vector<16x1xf32> to vector<16x128xf32>
    %77 = arith.addf %75, %76 : vector<16x128xf32>
    %cst_30 = arith.constant 0.000000e+00 : f32
    %78 = vector.broadcast %cst_30 : f32 to vector<16x128xf32>
    %79 = arith.maximumf %77, %78 : vector<16x128xf32>
    %cst_31 = arith.constant 0.000000e+00 : f32
    %80 = vector.broadcast %cst_31 : f32 to vector<4x512xf32>
    %c0_32 = arith.constant 0 : index
    %c0_33 = arith.constant 0 : index
    %81 = vector.load %arg16[%c0_32, %c0_33] : memref<4x512xf32, #tpu.memory_space<vmem>>, vector<4x512xf32>
    tpu.vector_store %arg16[%c0_32, %c0_33], %80 {strides = array<i32>} : memref<4x512xf32, #tpu.memory_space<vmem>>, vector<4x512xf32>,
    %82 = vector.extract_strided_slice %79 {offsets = [0, 0], sizes = [1, 32], strides = [1, 1]} : vector<16x128xf32> to vector<1x32xf32>
    %c0_34 = arith.constant 0 : index
    %c0_35 = arith.constant 0 : index
    %83 = vector.load %arg16[%c0_34, %c0_35] : memref<4x512xf32, #tpu.memory_space<vmem>>, vector<1x32xf32>
    tpu.vector_store %arg16[%c0_34, %c0_35], %82 {strides = array<i32>} : memref<4x512xf32, #tpu.memory_space<vmem>>, vector<1x32xf32>,
    %84 = vector.extract_strided_slice %79 {offsets = [1, 0], sizes = [1, 32], strides = [1, 1]} : vector<16x128xf32> to vector<1x32xf32>
    %c0_36 = arith.constant 0 : index
    %c32 = arith.constant 32 : index
    %85 = vector.load %arg16[%c0_36, %c32] : memref<4x512xf32, #tpu.memory_space<vmem>>, vector<1x32xf32>
    tpu.vector_store %arg16[%c0_36, %c32], %84 {strides = array<i32>} : memref<4x512xf32, #tpu.memory_space<vmem>>, vector<1x32xf32>,
    %86 = vector.extract_strided_slice %79 {offsets = [2, 0], sizes = [1, 32], strides = [1, 1]} : vector<16x128xf32> to vector<1x32xf32>
    %c0_37 = arith.constant 0 : index
    %c64 = arith.constant 64 : index
    %87 = vector.load %arg16[%c0_37, %c64] : memref<4x512xf32, #tpu.memory_space<vmem>>, vector<1x32xf32>
    tpu.vector_store %arg16[%c0_37, %c64], %86 {strides = array<i32>} : memref<4x512xf32, #tpu.memory_space<vmem>>, vector<1x32xf32>,
    %88 = vector.extract_strided_slice %79 {offsets = [3, 0], sizes = [1, 32], strides = [1, 1]} : vector<16x128xf32> to vector<1x32xf32>
    %c0_38 = arith.constant 0 : index
    %c96 = arith.constant 96 : index
    %89 = vector.load %arg16[%c0_38, %c96] : memref<4x512xf32, #tpu.memory_space<vmem>>, vector<1x32xf32>
    tpu.vector_store %arg16[%c0_38, %c96], %88 {strides = array<i32>} : memref<4x512xf32, #tpu.memory_space<vmem>>, vector<1x32xf32>,
    %90 = vector.extract_strided_slice %79 {offsets = [4, 0], sizes = [1, 32], strides = [1, 1]} : vector<16x128xf32> to vector<1x32xf32>
    %c0_39 = arith.constant 0 : index
    %c128 = arith.constant 128 : index
    %91 = vector.load %arg16[%c0_39, %c128] : memref<4x512xf32, #tpu.memory_space<vmem>>, vector<1x32xf32>
    tpu.vector_store %arg16[%c0_39, %c128], %90 {strides = array<i32>} : memref<4x512xf32, #tpu.memory_space<vmem>>, vector<1x32xf32>,
    %92 = vector.extract_strided_slice %79 {offsets = [5, 0], sizes = [1, 32], strides = [1, 1]} : vector<16x128xf32> to vector<1x32xf32>
    %c0_40 = arith.constant 0 : index
    %c160 = arith.constant 160 : index
    %93 = vector.load %arg16[%c0_40, %c160] : memref<4x512xf32, #tpu.memory_space<vmem>>, vector<1x32xf32>
    tpu.vector_store %arg16[%c0_40, %c160], %92 {strides = array<i32>} : memref<4x512xf32, #tpu.memory_space<vmem>>, vector<1x32xf32>,
    %94 = vector.extract_strided_slice %79 {offsets = [6, 0], sizes = [1, 32], strides = [1, 1]} : vector<16x128xf32> to vector<1x32xf32>
    %c0_41 = arith.constant 0 : index
    %c192 = arith.constant 192 : index
    %95 = vector.load %arg16[%c0_41, %c192] : memref<4x512xf32, #tpu.memory_space<vmem>>, vector<1x32xf32>
    tpu.vector_store %arg16[%c0_41, %c192], %94 {strides = array<i32>} : memref<4x512xf32, #tpu.memory_space<vmem>>, vector<1x32xf32>,
    %96 = vector.extract_strided_slice %79 {offsets = [7, 0], sizes = [1, 32], strides = [1, 1]} : vector<16x128xf32> to vector<1x32xf32>
    %c0_42 = arith.constant 0 : index
    %c224 = arith.constant 224 : index
    %97 = vector.load %arg16[%c0_42, %c224] : memref<4x512xf32, #tpu.memory_space<vmem>>, vector<1x32xf32>
    tpu.vector_store %arg16[%c0_42, %c224], %96 {strides = array<i32>} : memref<4x512xf32, #tpu.memory_space<vmem>>, vector<1x32xf32>,
    %98 = vector.extract_strided_slice %79 {offsets = [8, 0], sizes = [1, 32], strides = [1, 1]} : vector<16x128xf32> to vector<1x32xf32>
    %c0_43 = arith.constant 0 : index
    %c256 = arith.constant 256 : index
    %99 = vector.load %arg16[%c0_43, %c256] : memref<4x512xf32, #tpu.memory_space<vmem>>, vector<1x32xf32>
    tpu.vector_store %arg16[%c0_43, %c256], %98 {strides = array<i32>} : memref<4x512xf32, #tpu.memory_space<vmem>>, vector<1x32xf32>,
    %100 = vector.extract_strided_slice %79 {offsets = [0, 32], sizes = [1, 32], strides = [1, 1]} : vector<16x128xf32> to vector<1x32xf32>
    %c1 = arith.constant 1 : index
    %c0_44 = arith.constant 0 : index
    %101 = vector.load %arg16[%c1, %c0_44] : memref<4x512xf32, #tpu.memory_space<vmem>>, vector<1x32xf32>
    tpu.vector_store %arg16[%c1, %c0_44], %100 {strides = array<i32>} : memref<4x512xf32, #tpu.memory_space<vmem>>, vector<1x32xf32>,
    %102 = vector.extract_strided_slice %79 {offsets = [1, 32], sizes = [1, 32], strides = [1, 1]} : vector<16x128xf32> to vector<1x32xf32>
    %c1_45 = arith.constant 1 : index
    %c32_46 = arith.constant 32 : index
    %103 = vector.load %arg16[%c1_45, %c32_46] : memref<4x512xf32, #tpu.memory_space<vmem>>, vector<1x32xf32>
    tpu.vector_store %arg16[%c1_45, %c32_46], %102 {strides = array<i32>} : memref<4x512xf32, #tpu.memory_space<vmem>>, vector<1x32xf32>,
    %104 = vector.extract_strided_slice %79 {offsets = [2, 32], sizes = [1, 32], strides = [1, 1]} : vector<16x128xf32> to vector<1x32xf32>
    %c1_47 = arith.constant 1 : index
    %c64_48 = arith.constant 64 : index
    %105 = vector.load %arg16[%c1_47, %c64_48] : memref<4x512xf32, #tpu.memory_space<vmem>>, vector<1x32xf32>
    tpu.vector_store %arg16[%c1_47, %c64_48], %104 {strides = array<i32>} : memref<4x512xf32, #tpu.memory_space<vmem>>, vector<1x32xf32>,
    %106 = vector.extract_strided_slice %79 {offsets = [3, 32], sizes = [1, 32], strides = [1, 1]} : vector<16x128xf32> to vector<1x32xf32>
    %c1_49 = arith.constant 1 : index
    %c96_50 = arith.constant 96 : index
    %107 = vector.load %arg16[%c1_49, %c96_50] : memref<4x512xf32, #tpu.memory_space<vmem>>, vector<1x32xf32>
    tpu.vector_store %arg16[%c1_49, %c96_50], %106 {strides = array<i32>} : memref<4x512xf32, #tpu.memory_space<vmem>>, vector<1x32xf32>,
    %108 = vector.extract_strided_slice %79 {offsets = [4, 32], sizes = [1, 32], strides = [1, 1]} : vector<16x128xf32> to vector<1x32xf32>
    %c1_51 = arith.constant 1 : index
    %c128_52 = arith.constant 128 : index
    %109 = vector.load %arg16[%c1_51, %c128_52] : memref<4x512xf32, #tpu.memory_space<vmem>>, vector<1x32xf32>
    tpu.vector_store %arg16[%c1_51, %c128_52], %108 {strides = array<i32>} : memref<4x512xf32, #tpu.memory_space<vmem>>, vector<1x32xf32>,
    %110 = vector.extract_strided_slice %79 {offsets = [5, 32], sizes = [1, 32], strides = [1, 1]} : vector<16x128xf32> to vector<1x32xf32>
    %c1_53 = arith.constant 1 : index
    %c160_54 = arith.constant 160 : index
    %111 = vector.load %arg16[%c1_53, %c160_54] : memref<4x512xf32, #tpu.memory_space<vmem>>, vector<1x32xf32>
    tpu.vector_store %arg16[%c1_53, %c160_54], %110 {strides = array<i32>} : memref<4x512xf32, #tpu.memory_space<vmem>>, vector<1x32xf32>,
    %112 = vector.extract_strided_slice %79 {offsets = [6, 32], sizes = [1, 32], strides = [1, 1]} : vector<16x128xf32> to vector<1x32xf32>
    %c1_55 = arith.constant 1 : index
    %c192_56 = arith.constant 192 : index
    %113 = vector.load %arg16[%c1_55, %c192_56] : memref<4x512xf32, #tpu.memory_space<vmem>>, vector<1x32xf32>
    tpu.vector_store %arg16[%c1_55, %c192_56], %112 {strides = array<i32>} : memref<4x512xf32, #tpu.memory_space<vmem>>, vector<1x32xf32>,
    %114 = vector.extract_strided_slice %79 {offsets = [7, 32], sizes = [1, 32], strides = [1, 1]} : vector<16x128xf32> to vector<1x32xf32>
    %c1_57 = arith.constant 1 : index
    %c224_58 = arith.constant 224 : index
    %115 = vector.load %arg16[%c1_57, %c224_58] : memref<4x512xf32, #tpu.memory_space<vmem>>, vector<1x32xf32>
    tpu.vector_store %arg16[%c1_57, %c224_58], %114 {strides = array<i32>} : memref<4x512xf32, #tpu.memory_space<vmem>>, vector<1x32xf32>,
    %116 = vector.extract_strided_slice %79 {offsets = [8, 32], sizes = [1, 32], strides = [1, 1]} : vector<16x128xf32> to vector<1x32xf32>
    %c1_59 = arith.constant 1 : index
    %c256_60 = arith.constant 256 : index
    %117 = vector.load %arg16[%c1_59, %c256_60] : memref<4x512xf32, #tpu.memory_space<vmem>>, vector<1x32xf32>
    tpu.vector_store %arg16[%c1_59, %c256_60], %116 {strides = array<i32>} : memref<4x512xf32, #tpu.memory_space<vmem>>, vector<1x32xf32>,
    %118 = vector.extract_strided_slice %79 {offsets = [0, 64], sizes = [1, 32], strides = [1, 1]} : vector<16x128xf32> to vector<1x32xf32>
    %c2 = arith.constant 2 : index
    %c0_61 = arith.constant 0 : index
    %119 = vector.load %arg16[%c2, %c0_61] : memref<4x512xf32, #tpu.memory_space<vmem>>, vector<1x32xf32>
    tpu.vector_store %arg16[%c2, %c0_61], %118 {strides = array<i32>} : memref<4x512xf32, #tpu.memory_space<vmem>>, vector<1x32xf32>,
    %120 = vector.extract_strided_slice %79 {offsets = [1, 64], sizes = [1, 32], strides = [1, 1]} : vector<16x128xf32> to vector<1x32xf32>
    %c2_62 = arith.constant 2 : index
    %c32_63 = arith.constant 32 : index
    %121 = vector.load %arg16[%c2_62, %c32_63] : memref<4x512xf32, #tpu.memory_space<vmem>>, vector<1x32xf32>
    tpu.vector_store %arg16[%c2_62, %c32_63], %120 {strides = array<i32>} : memref<4x512xf32, #tpu.memory_space<vmem>>, vector<1x32xf32>,
    %122 = vector.extract_strided_slice %79 {offsets = [2, 64], sizes = [1, 32], strides = [1, 1]} : vector<16x128xf32> to vector<1x32xf32>
    %c2_64 = arith.constant 2 : index
    %c64_65 = arith.constant 64 : index
    %123 = vector.load %arg16[%c2_64, %c64_65] : memref<4x512xf32, #tpu.memory_space<vmem>>, vector<1x32xf32>
    tpu.vector_store %arg16[%c2_64, %c64_65], %122 {strides = array<i32>} : memref<4x512xf32, #tpu.memory_space<vmem>>, vector<1x32xf32>,
    %124 = vector.extract_strided_slice %79 {offsets = [3, 64], sizes = [1, 32], strides = [1, 1]} : vector<16x128xf32> to vector<1x32xf32>
    %c2_66 = arith.constant 2 : index
    %c96_67 = arith.constant 96 : index
    %125 = vector.load %arg16[%c2_66, %c96_67] : memref<4x512xf32, #tpu.memory_space<vmem>>, vector<1x32xf32>
    tpu.vector_store %arg16[%c2_66, %c96_67], %124 {strides = array<i32>} : memref<4x512xf32, #tpu.memory_space<vmem>>, vector<1x32xf32>,
    %126 = vector.extract_strided_slice %79 {offsets = [4, 64], sizes = [1, 32], strides = [1, 1]} : vector<16x128xf32> to vector<1x32xf32>
    %c2_68 = arith.constant 2 : index
    %c128_69 = arith.constant 128 : index
    %127 = vector.load %arg16[%c2_68, %c128_69] : memref<4x512xf32, #tpu.memory_space<vmem>>, vector<1x32xf32>
    tpu.vector_store %arg16[%c2_68, %c128_69], %126 {strides = array<i32>} : memref<4x512xf32, #tpu.memory_space<vmem>>, vector<1x32xf32>,
    %128 = vector.extract_strided_slice %79 {offsets = [5, 64], sizes = [1, 32], strides = [1, 1]} : vector<16x128xf32> to vector<1x32xf32>
    %c2_70 = arith.constant 2 : index
    %c160_71 = arith.constant 160 : index
    %129 = vector.load %arg16[%c2_70, %c160_71] : memref<4x512xf32, #tpu.memory_space<vmem>>, vector<1x32xf32>
    tpu.vector_store %arg16[%c2_70, %c160_71], %128 {strides = array<i32>} : memref<4x512xf32, #tpu.memory_space<vmem>>, vector<1x32xf32>,
    %130 = vector.extract_strided_slice %79 {offsets = [6, 64], sizes = [1, 32], strides = [1, 1]} : vector<16x128xf32> to vector<1x32xf32>
    %c2_72 = arith.constant 2 : index
    %c192_73 = arith.constant 192 : index
    %131 = vector.load %arg16[%c2_72, %c192_73] : memref<4x512xf32, #tpu.memory_space<vmem>>, vector<1x32xf32>
    tpu.vector_store %arg16[%c2_72, %c192_73], %130 {strides = array<i32>} : memref<4x512xf32, #tpu.memory_space<vmem>>, vector<1x32xf32>,
    %132 = vector.extract_strided_slice %79 {offsets = [7, 64], sizes = [1, 32], strides = [1, 1]} : vector<16x128xf32> to vector<1x32xf32>
    %c2_74 = arith.constant 2 : index
    %c224_75 = arith.constant 224 : index
    %133 = vector.load %arg16[%c2_74, %c224_75] : memref<4x512xf32, #tpu.memory_space<vmem>>, vector<1x32xf32>
    tpu.vector_store %arg16[%c2_74, %c224_75], %132 {strides = array<i32>} : memref<4x512xf32, #tpu.memory_space<vmem>>, vector<1x32xf32>,
    %134 = vector.extract_strided_slice %79 {offsets = [8, 64], sizes = [1, 32], strides = [1, 1]} : vector<16x128xf32> to vector<1x32xf32>
    %c2_76 = arith.constant 2 : index
    %c256_77 = arith.constant 256 : index
    %135 = vector.load %arg16[%c2_76, %c256_77] : memref<4x512xf32, #tpu.memory_space<vmem>>, vector<1x32xf32>
    tpu.vector_store %arg16[%c2_76, %c256_77], %134 {strides = array<i32>} : memref<4x512xf32, #tpu.memory_space<vmem>>, vector<1x32xf32>,
    %136 = vector.extract_strided_slice %79 {offsets = [0, 96], sizes = [1, 32], strides = [1, 1]} : vector<16x128xf32> to vector<1x32xf32>
    %c3 = arith.constant 3 : index
    %c0_78 = arith.constant 0 : index
    %137 = vector.load %arg16[%c3, %c0_78] : memref<4x512xf32, #tpu.memory_space<vmem>>, vector<1x32xf32>
    tpu.vector_store %arg16[%c3, %c0_78], %136 {strides = array<i32>} : memref<4x512xf32, #tpu.memory_space<vmem>>, vector<1x32xf32>,
    %138 = vector.extract_strided_slice %79 {offsets = [1, 96], sizes = [1, 32], strides = [1, 1]} : vector<16x128xf32> to vector<1x32xf32>
    %c3_79 = arith.constant 3 : index
    %c32_80 = arith.constant 32 : index
    %139 = vector.load %arg16[%c3_79, %c32_80] : memref<4x512xf32, #tpu.memory_space<vmem>>, vector<1x32xf32>
    tpu.vector_store %arg16[%c3_79, %c32_80], %138 {strides = array<i32>} : memref<4x512xf32, #tpu.memory_space<vmem>>, vector<1x32xf32>,
    %140 = vector.extract_strided_slice %79 {offsets = [2, 96], sizes = [1, 32], strides = [1, 1]} : vector<16x128xf32> to vector<1x32xf32>
    %c3_81 = arith.constant 3 : index
    %c64_82 = arith.constant 64 : index
    %141 = vector.load %arg16[%c3_81, %c64_82] : memref<4x512xf32, #tpu.memory_space<vmem>>, vector<1x32xf32>
    tpu.vector_store %arg16[%c3_81, %c64_82], %140 {strides = array<i32>} : memref<4x512xf32, #tpu.memory_space<vmem>>, vector<1x32xf32>,
    %142 = vector.extract_strided_slice %79 {offsets = [3, 96], sizes = [1, 32], strides = [1, 1]} : vector<16x128xf32> to vector<1x32xf32>
    %c3_83 = arith.constant 3 : index
    %c96_84 = arith.constant 96 : index
    %143 = vector.load %arg16[%c3_83, %c96_84] : memref<4x512xf32, #tpu.memory_space<vmem>>, vector<1x32xf32>
    tpu.vector_store %arg16[%c3_83, %c96_84], %142 {strides = array<i32>} : memref<4x512xf32, #tpu.memory_space<vmem>>, vector<1x32xf32>,
    %144 = vector.extract_strided_slice %79 {offsets = [4, 96], sizes = [1, 32], strides = [1, 1]} : vector<16x128xf32> to vector<1x32xf32>
    %c3_85 = arith.constant 3 : index
    %c128_86 = arith.constant 128 : index
    %145 = vector.load %arg16[%c3_85, %c128_86] : memref<4x512xf32, #tpu.memory_space<vmem>>, vector<1x32xf32>
    tpu.vector_store %arg16[%c3_85, %c128_86], %144 {strides = array<i32>} : memref<4x512xf32, #tpu.memory_space<vmem>>, vector<1x32xf32>,
    %146 = vector.extract_strided_slice %79 {offsets = [5, 96], sizes = [1, 32], strides = [1, 1]} : vector<16x128xf32> to vector<1x32xf32>
    %c3_87 = arith.constant 3 : index
    %c160_88 = arith.constant 160 : index
    %147 = vector.load %arg16[%c3_87, %c160_88] : memref<4x512xf32, #tpu.memory_space<vmem>>, vector<1x32xf32>
    tpu.vector_store %arg16[%c3_87, %c160_88], %146 {strides = array<i32>} : memref<4x512xf32, #tpu.memory_space<vmem>>, vector<1x32xf32>,
    %148 = vector.extract_strided_slice %79 {offsets = [6, 96], sizes = [1, 32], strides = [1, 1]} : vector<16x128xf32> to vector<1x32xf32>
    %c3_89 = arith.constant 3 : index
    %c192_90 = arith.constant 192 : index
    %149 = vector.load %arg16[%c3_89, %c192_90] : memref<4x512xf32, #tpu.memory_space<vmem>>, vector<1x32xf32>
    tpu.vector_store %arg16[%c3_89, %c192_90], %148 {strides = array<i32>} : memref<4x512xf32, #tpu.memory_space<vmem>>, vector<1x32xf32>,
    %150 = vector.extract_strided_slice %79 {offsets = [7, 96], sizes = [1, 32], strides = [1, 1]} : vector<16x128xf32> to vector<1x32xf32>
    %c3_91 = arith.constant 3 : index
    %c224_92 = arith.constant 224 : index
    %151 = vector.load %arg16[%c3_91, %c224_92] : memref<4x512xf32, #tpu.memory_space<vmem>>, vector<1x32xf32>
    tpu.vector_store %arg16[%c3_91, %c224_92], %150 {strides = array<i32>} : memref<4x512xf32, #tpu.memory_space<vmem>>, vector<1x32xf32>,
    %152 = vector.extract_strided_slice %79 {offsets = [8, 96], sizes = [1, 32], strides = [1, 1]} : vector<16x128xf32> to vector<1x32xf32>
    %c3_93 = arith.constant 3 : index
    %c256_94 = arith.constant 256 : index
    %153 = vector.load %arg16[%c3_93, %c256_94] : memref<4x512xf32, #tpu.memory_space<vmem>>, vector<1x32xf32>
    tpu.vector_store %arg16[%c3_93, %c256_94], %152 {strides = array<i32>} : memref<4x512xf32, #tpu.memory_space<vmem>>, vector<1x32xf32>,
    %c0_95 = arith.constant 0 : index
    %c0_96 = arith.constant 0 : index
    %154 = vector.load %arg16[%c0_95, %c0_96] : memref<4x512xf32, #tpu.memory_space<vmem>>, vector<4x512xf32>
    %155 = arith.truncf %154 : vector<4x512xf32> to vector<4x512xbf16>
    %c0_97 = arith.constant 0 : index
    %c0_98 = arith.constant 0 : index
    %156 = vector.load %arg9[%c0_97, %c0_98] : memref<512x512xbf16, #tpu.memory_space<vmem>>, vector<512x512xbf16>
    %cst_99 = arith.constant dense<0.000000e+00> : vector<4x512xf32>
    %157 = tpu.matmul %155, %156, %cst_99 {dimension_numbers = #tpu.dot_dimension_numbers<[1], [0], [0], [1], [0, 0, 1, 1], [], []>} : vector<4x512xbf16>, vector<512x512xbf16>, vector<4x512xf32> -> vector<4x512xf32>
    %c0_100 = arith.constant 0 : index
    %c0_101 = arith.constant 0 : index
    %158 = vector.load %arg10[%c0_100, %c0_101] : memref<1x512xf32, #tpu.memory_space<vmem>>, vector<1x512xf32>
    %159 = vector.broadcast %158 : vector<1x512xf32> to vector<4x512xf32>
    %160 = arith.addf %157, %159 : vector<4x512xf32>
    %cst_102 = arith.constant 0.000000e+00 : f32
    %161 = vector.broadcast %cst_102 : f32 to vector<4x512xf32>
    %162 = arith.maximumf %160, %161 : vector<4x512xf32>
    %163 = arith.truncf %162 : vector<4x512xf32> to vector<4x512xbf16>
    %c0_103 = arith.constant 0 : index
    %c0_104 = arith.constant 0 : index
    %164 = vector.load %arg11[%c0_103, %c0_104] : memref<512x256xbf16, #tpu.memory_space<vmem>>, vector<512x256xbf16>
    %cst_105 = arith.constant dense<0.000000e+00> : vector<4x256xf32>
    %165 = tpu.matmul %163, %164, %cst_105 {dimension_numbers = #tpu.dot_dimension_numbers<[1], [0], [0], [1], [0, 0, 1, 1], [], []>} : vector<4x512xbf16>, vector<512x256xbf16>, vector<4x256xf32> -> vector<4x256xf32>
    %c0_106 = arith.constant 0 : index
    %c0_107 = arith.constant 0 : index
    %166 = vector.load %arg12[%c0_106, %c0_107] : memref<1x256xf32, #tpu.memory_space<vmem>>, vector<1x256xf32>
    %167 = vector.broadcast %166 : vector<1x256xf32> to vector<4x256xf32>
    %168 = arith.addf %165, %167 : vector<4x256xf32>
    %cst_108 = arith.constant 0.000000e+00 : f32
    %169 = vector.broadcast %cst_108 : f32 to vector<4x256xf32>
    %170 = arith.cmpf ogt, %168, %169 : vector<4x256xf32>
    %cst_109 = arith.constant 2.000000e-01 : f32
    %171 = vector.broadcast %cst_109 : f32 to vector<4x256xf32>
    %172 = arith.mulf %171, %168 : vector<4x256xf32>
    %173 = arith.select %170, %168, %172 : vector<4x256xi1>, vector<4x256xf32>
    %c0_110 = arith.constant 0 : index
    %c0_111 = arith.constant 0 : index
    %174 = vector.load %arg13[%c0_110, %c0_111] : memref<1x256xf32, #tpu.memory_space<vmem>>, vector<1x256xf32>
    %175 = vector.broadcast %174 : vector<1x256xf32> to vector<4x256xf32>
    %176 = arith.mulf %173, %175 : vector<4x256xf32>
    %cst_112 = arith.constant dense<0.000000e+00> : vector<4xf32>
    %177 = vector.multi_reduction <add>, %176, %cst_112 [1] : vector<4x256xf32> to vector<4xf32>
    %178 = vector.shape_cast %177 : vector<4xf32> to vector<4x1xf32>
    %c0_113 = arith.constant 0 : index
    %c0_114 = arith.constant 0 : index
    %179 = vector.load %arg14[%c0_113, %c0_114] : memref<1x1xf32, #tpu.memory_space<vmem>>, vector<1x1xf32>
    %180 = vector.broadcast %179 : vector<1x1xf32> to vector<4x1xf32>
    %181 = arith.addf %178, %180 : vector<4x1xf32>
    %182 = arith.negf %181 : vector<4x1xf32>
    %183 = math.exp %182 : vector<4x1xf32>
    %cst_115 = arith.constant 1.000000e+00 : f32
    %184 = vector.broadcast %cst_115 : f32 to vector<4x1xf32>
    %185 = arith.addf %184, %183 : vector<4x1xf32>
    %186 = arith.divf %184, %185 : vector<4x1xf32>
    %c0_116 = arith.constant 0 : index
    %c0_117 = arith.constant 0 : index
    %187 = vector.load %arg15[%c0_116, %c0_117] : memref<4x1xf32, #tpu.memory_space<vmem>>, vector<4x1xf32>
    tpu.vector_store %arg15[%c0_116, %c0_117], %186 {strides = array<i32>} : memref<4x1xf32, #tpu.memory_space<vmem>>, vector<4x1xf32>,
    return
  }
}

</mosaic_0001>

<llo_original>
// kernel: fwd.1
$region0: #{fwd.1}
  #allocation0 [shape = 'u32[]', space=smem, size = 0x4, offset = 0x4, fixed_abs, tag = 'smem constant byte address 0x4 - core index']
  #allocation1 [shape = 'u32[144,128]{1,0:T(1,128)}', space=vmem, size = 0x12000, scoped, tag = 'internal scratch']
  #allocation2 [shape = 'f32[4,512]{1,0:T(4,128)}', space=vmem, size = 0x2000, scoped, tag = 'scratch operand']
  #allocation3 [shape = 'f32[1,1]{1,0:T(1,128)S(1)}', space=vmem, size = 0x200, scoped, tag = 'scoped memory for fwd.1']
  %s0 = inlined_call_operand.vmem [shape: bf16[480,128], index: 0, kind: input, shape index: {}]
  %s1 = inlined_call_operand.vmem [shape: bf16[16,480], index: 1, kind: input, shape index: {}]
  %s2 = inlined_call_operand.vmem [shape: f32[16,1], index: 2, kind: input, shape index: {}]
  %s3 = inlined_call_operand.vmem [shape: f32[16,1], index: 3, kind: input, shape index: {}, may-alias: {3,7}]
  %s4 = inlined_call_operand.vmem [shape: f32[16,1], index: 4, kind: input, shape index: {}, may-alias: {4,8}]
  %s5 = inlined_call_operand.vmem [shape: f32[16,64], index: 5, kind: input, shape index: {}]
  %s6 = inlined_call_operand.vmem [shape: f32[16,1], index: 6, kind: input, shape index: {}]
  %s7 = inlined_call_operand.vmem [shape: f32[16,1], index: 7, kind: input, shape index: {}, may-alias: {3,7}]
  %s8 = inlined_call_operand.vmem [shape: f32[16,1], index: 8, kind: input, shape index: {}, may-alias: {4,8}]
  %s9 = inlined_call_operand.vmem [shape: bf16[512,512], index: 9, kind: input, shape index: {}]
  %s10 = inlined_call_operand.vmem [shape: f32[1,512], index: 10, kind: input, shape index: {}]
  %s11 = inlined_call_operand.vmem [shape: bf16[512,256], index: 11, kind: input, shape index: {}]
  %s12 = inlined_call_operand.vmem [shape: f32[1,256], index: 12, kind: input, shape index: {}]
  %s13 = inlined_call_operand.vmem [shape: f32[1,256], index: 13, kind: input, shape index: {}]
  %s14 = inlined_call_operand.<no memory space> [shape: f32[1,1], index: 14, kind: input, shape index: {}]
  %s15 = inlined_call_operand.vmem [shape: f32[4,1], index: 15, kind: output, shape index: {}]
  %s16 = sld [smem:[#allocation0]]
  $region70: #{fwd.1} parent=0
    _
  %s18 = ssub.s32 1, %s16
  %s19 = scalar_select 0, %s18, %s16
  %v20 = vstv %s14
  %21 = vst [vmem:[#allocation3] sm:$0x1] %v20
  // Predicated region
  $region2: #{fwd.1} parent=0 // pred_check
    _
  $region3: #{fwd.1} parent=0 // pred_check_branch
    %23 = sbr.rel (0) target = $region5
  $region4: #{fwd.1} parent=0 // pred_region
    _
  $region5: #{fwd.1} parent=0 // pred_fallthru
    _
  // Predicated region
  $region6: #{fwd.1} parent=0 // pred_check
    _
  $region7: #{fwd.1} parent=0 // pred_check_branch
    %25 = sbr.rel (0) target = $region9
  $region8: #{fwd.1} parent=0 // pred_region
    _
  $region9: #{fwd.1} parent=0 // pred_fallthru
    _
  // Predicated region
  $region10: #{fwd.1} parent=0 // pred_check
    _
  $region11: #{fwd.1} parent=0 // pred_check_branch
    %27 = sbr.rel (0) target = $region13
  $region12: #{fwd.1} parent=0 // pred_region
    _
  $region13: #{fwd.1} parent=0 // pred_fallthru
    _
  // Predicated region
  $region14: #{fwd.1} parent=0 // pred_check
    _
  $region15: #{fwd.1} parent=0 // pred_check_branch
    %29 = sbr.rel (0) target = $region17
  $region16: #{fwd.1} parent=0 // pred_region
    _
  $region17: #{fwd.1} parent=0 // pred_fallthru
    _
  // Predicated region
  $region18: #{fwd.1} parent=0 // pred_check
    _
  $region19: #{fwd.1} parent=0 // pred_check_branch
    %31 = sbr.rel (0) target = $region21
  $region20: #{fwd.1} parent=0 // pred_region
    _
  $region21: #{fwd.1} parent=0 // pred_fallthru
    _
  // Predicated region
  $region22: #{fwd.1} parent=0 // pred_check
    _
  $region23: #{fwd.1} parent=0 // pred_check_branch
    %33 = sbr.rel (0) target = $region25
  $region24: #{fwd.1} parent=0 // pred_region
    _
  $region25: #{fwd.1} parent=0 // pred_fallthru
    _
  // Predicated region
  $region26: #{fwd.1} parent=0 // pred_check
    _
  $region27: #{fwd.1} parent=0 // pred_check_branch
    %35 = sbr.rel (0) target = $region29
  $region28: #{fwd.1} parent=0 // pred_region
    _
  $region29: #{fwd.1} parent=0 // pred_fallthru
    _
  // Predicated region
  $region30: #{fwd.1} parent=0 // pred_check
    _
  $region31: #{fwd.1} parent=0 // pred_check_branch
    %37 = sbr.rel (0) target = $region33
  $region32: #{fwd.1} parent=0 // pred_region
    _
  $region33: #{fwd.1} parent=0 // pred_fallthru
    _
  // Predicated region
  $region34: #{fwd.1} parent=0 // pred_check
    _
  $region35: #{fwd.1} parent=0 // pred_check_branch
    %39 = sbr.rel (0) target = $region37
  $region36: #{fwd.1} parent=0 // pred_region
    _
  $region37: #{fwd.1} parent=0 // pred_fallthru
    _
  // Predicated region
  $region38: #{fwd.1} parent=0 // pred_check
    _
  $region39: #{fwd.1} parent=0 // pred_check_branch
    %41 = sbr.rel (0) target = $region41
  $region40: #{fwd.1} parent=0 // pred_region
    _
  $region41: #{fwd.1} parent=0 // pred_fallthru
    _
  // Predicated region
  $region42: #{fwd.1} parent=0 // pred_check
    _
  $region43: #{fwd.1} parent=0 // pred_check_branch
    %43 = sbr.rel (0) target = $region45
  $region44: #{fwd.1} parent=0 // pred_region
    _
  $region45: #{fwd.1} parent=0 // pred_fallthru
    _
  // Predicated region
  $region46: #{fwd.1} parent=0 // pred_check
    _
  $region47: #{fwd.1} parent=0 // pred_check_branch
    %45 = sbr.rel (0) target = $region49
  $region48: #{fwd.1} parent=0 // pred_region
    _
  $region49: #{fwd.1} parent=0 // pred_fallthru
    _
  // Predicated region
  $region50: #{fwd.1} parent=0 // pred_check
    _
  $region51: #{fwd.1} parent=0 // pred_check_branch
    %47 = sbr.rel (0) target = $region53
  $region52: #{fwd.1} parent=0 // pred_region
    _
  $region53: #{fwd.1} parent=0 // pred_fallthru
    _
  // Predicated region
  $region54: #{fwd.1} parent=0 // pred_check
    _
  $region55: #{fwd.1} parent=0 // pred_check_branch
    %49 = sbr.rel (0) target = $region57
  $region56: #{fwd.1} parent=0 // pred_region
    _
  $region57: #{fwd.1} parent=0 // pred_fallthru
    _
  // Predicated region
  $region58: #{fwd.1} parent=0 // pred_check
    _
  $region59: #{fwd.1} parent=0 // pred_check_branch
    %51 = sbr.rel (0) target = $region61
  $region60: #{fwd.1} parent=0 // pred_region
    _
  $region61: #{fwd.1} parent=0 // pred_fallthru
    _
  %v53 = vld [vmem:[%s1] sm:$0xff]
  %v54 = vld [vmem:[%s1 + $0x8] sm:$0xff]
  %v55 = vld [vmem:[%s1 + $0x10] sm:$0xff]
  %v56 = vld [vmem:[%s1 + $0x18] sm:$0xff]
  %v57 = vld [vmem:[%s0] sm:$0xf]
  %v58 = vld [vmem:[%s0 + $0x4] sm:$0xf]
  %v59 = vld [vmem:[%s0 + $0x8] sm:$0xf]
  %v60 = vld [vmem:[%s0 + $0xc] sm:$0xf]
  %v61 = vld [vmem:[%s0 + $0x10] sm:$0xf]
  %v62 = vld [vmem:[%s0 + $0x14] sm:$0xf]
  %v63 = vld [vmem:[%s0 + $0x18] sm:$0xf]
  %v64 = vld [vmem:[%s0 + $0x1c] sm:$0xf]
  %v65 = vld [vmem:[%s0 + $0x20] sm:$0xf]
  %v66 = vld [vmem:[%s0 + $0x24] sm:$0xf]
  %v67 = vld [vmem:[%s0 + $0x28] sm:$0xf]
  %v68 = vld [vmem:[%s0 + $0x2c] sm:$0xf]
  %v69 = vld [vmem:[%s0 + $0x30] sm:$0xf]
  %v70 = vld [vmem:[%s0 + $0x34] sm:$0xf]
  %v71 = vld [vmem:[%s0 + $0x38] sm:$0xf]
  %v72 = vld [vmem:[%s0 + $0x3c] sm:$0xf]
  %v73 = vld [vmem:[%s0 + $0x40] sm:$0xf]
  %v74 = vld [vmem:[%s0 + $0x44] sm:$0xf]
  %v75 = vld [vmem:[%s0 + $0x48] sm:$0xf]
  %v76 = vld [vmem:[%s0 + $0x4c] sm:$0xf]
  %v77 = vld [vmem:[%s0 + $0x50] sm:$0xf]
  %v78 = vld [vmem:[%s0 + $0x54] sm:$0xf]
  %v79 = vld [vmem:[%s0 + $0x58] sm:$0xf]
  %v80 = vld [vmem:[%s0 + $0x5c] sm:$0xf]
  %v81 = vld [vmem:[%s0 + $0x60] sm:$0xf]
  %v82 = vld [vmem:[%s0 + $0x64] sm:$0xf]
  %v83 = vld [vmem:[%s0 + $0x68] sm:$0xf]
  %v84 = vld [vmem:[%s0 + $0x6c] sm:$0xf]
  %v85 = vld [vmem:[%s0 + $0x70] sm:$0xf]
  %v86 = vld [vmem:[%s0 + $0x74] sm:$0xf]
  %v87 = vld [vmem:[%s0 + $0x78] sm:$0xf]
  %v88 = vld [vmem:[%s0 + $0x7c] sm:$0xf]
  %v89 = vld [vmem:[%s0 + $0x80] sm:$0xf]
  %v90 = vld [vmem:[%s0 + $0x84] sm:$0xf]
  %v91 = vld [vmem:[%s0 + $0x88] sm:$0xf]
  %v92 = vld [vmem:[%s0 + $0x8c] sm:$0xf]
  %v93 = vld [vmem:[%s0 + $0x90] sm:$0xf]
  %v94 = vld [vmem:[%s0 + $0x94] sm:$0xf]
  %v95 = vld [vmem:[%s0 + $0x98] sm:$0xf]
  %v96 = vld [vmem:[%s0 + $0x9c] sm:$0xf]
  %v97 = vld [vmem:[%s0 + $0xa0] sm:$0xf]
  %v98 = vld [vmem:[%s0 + $0xa4] sm:$0xf]
  %v99 = vld [vmem:[%s0 + $0xa8] sm:$0xf]
  %v100 = vld [vmem:[%s0 + $0xac] sm:$0xf]
  %v101 = vld [vmem:[%s0 + $0xb0] sm:$0xf]
  %v102 = vld [vmem:[%s0 + $0xb4] sm:$0xf]
  %v103 = vld [vmem:[%s0 + $0xb8] sm:$0xf]
  %v104 = vld [vmem:[%s0 + $0xbc] sm:$0xf]
  %v105 = vld [vmem:[%s0 + $0xc0] sm:$0xf]
  %v106 = vld [vmem:[%s0 + $0xc4] sm:$0xf]
  %v107 = vld [vmem:[%s0 + $0xc8] sm:$0xf]
  %v108 = vld [vmem:[%s0 + $0xcc] sm:$0xf]
  %v109 = vld [vmem:[%s0 + $0xd0] sm:$0xf]
  %v110 = vld [vmem:[%s0 + $0xd4] sm:$0xf]
  %v111 = vld [vmem:[%s0 + $0xd8] sm:$0xf]
  %v112 = vld [vmem:[%s0 + $0xdc] sm:$0xf]
  %v113 = vld [vmem:[%s0 + $0xe0] sm:$0xf]
  %v114 = vld [vmem:[%s0 + $0xe4] sm:$0xf]
  %v115 = vld [vmem:[%s0 + $0xe8] sm:$0xf]
  %v116 = vld [vmem:[%s0 + $0xec] sm:$0xf]
  %v117 = vld [vmem:[%s2] sm:$0xff]
  %v118 = vld [vmem:[%s2 + $0x8] sm:$0xff]
  %120 = vset.pattern.permute.xlu0 0
  %121 = vperm.xlu0 %120, %v117
  %v122 = vpop.permute.xlu0 %121
  %125 = vset.pattern.permute.xlu0 0
  %126 = vperm.xlu0 %125, %v118
  %v127 = vpop.permute.xlu0 %126
  %v133 = vunpack.c.l.b16 %v53
  %v134 = vunpack.c.h.b16 %v53
  %v135 = vunpack.c.l.b16 %v54
  %v136 = vunpack.c.h.b16 %v54
  %v137 = vunpack.c.l.b16 %v55
  %v138 = vunpack.c.h.b16 %v55
  %v139 = vunpack.c.l.b16 %v56
  %v140 = vunpack.c.h.b16 %v56
  %v141 = vpack.c.b16 %v137, %v133
  %v142 = vpack.c.b16 %v138, %v134
  %v143 = vpack.c.b16 %v139, %v135
  %v144 = vpack.c.b16 %v140, %v136
  %v208 = vunpack.c.l.b16 %v57
  %v209 = vunpack.c.l.b16 %v58
  %v210 = vunpack.c.l.b16 %v59
  %v211 = vunpack.c.l.b16 %v60
  %v212 = vunpack.c.l.b16 %v61
  %v213 = vunpack.c.l.b16 %v62
  %v214 = vunpack.c.l.b16 %v63
  %v215 = vunpack.c.l.b16 %v64
  %v216 = vunpack.c.l.b16 %v65
  %v217 = vunpack.c.l.b16 %v66
  %v218 = vunpack.c.l.b16 %v67
  %v219 = vunpack.c.l.b16 %v68
  %v220 = vunpack.c.l.b16 %v69
  %v221 = vunpack.c.l.b16 %v70
  %v222 = vunpack.c.l.b16 %v71
  %v223 = vunpack.c.l.b16 %v72
  %v224 = vunpack.c.l.b16 %v73
  %v225 = vunpack.c.l.b16 %v74
  %v226 = vunpack.c.l.b16 %v75
  %v227 = vunpack.c.l.b16 %v76
  %v228 = vunpack.c.l.b16 %v77
  %v229 = vunpack.c.l.b16 %v78
  %v230 = vunpack.c.l.b16 %v79
  %v231 = vunpack.c.l.b16 %v80
  %v232 = vunpack.c.l.b16 %v81
  %v233 = vunpack.c.l.b16 %v82
  %v234 = vunpack.c.l.b16 %v83
  %v235 = vunpack.c.l.b16 %v84
  %v236 = vunpack.c.l.b16 %v85
  %v237 = vunpack.c.l.b16 %v86
  %v238 = vunpack.c.l.b16 %v87
  %v239 = vunpack.c.l.b16 %v88
  %v240 = vunpack.c.l.b16 %v89
  %v241 = vunpack.c.l.b16 %v90
  %v242 = vunpack.c.l.b16 %v91
  %v243 = vunpack.c.l.b16 %v92
  %v244 = vunpack.c.l.b16 %v93
  %v245 = vunpack.c.l.b16 %v94
  %v246 = vunpack.c.l.b16 %v95
  %v247 = vunpack.c.l.b16 %v96
  %v248 = vunpack.c.l.b16 %v97
  %v249 = vunpack.c.l.b16 %v98
  %v250 = vunpack.c.l.b16 %v99
  %v251 = vunpack.c.l.b16 %v100
  %v252 = vunpack.c.l.b16 %v101
  %v253 = vunpack.c.l.b16 %v102
  %v254 = vunpack.c.l.b16 %v103
  %v255 = vunpack.c.l.b16 %v104
  %v256 = vunpack.c.l.b16 %v105
  %v257 = vunpack.c.l.b16 %v106
  %v258 = vunpack.c.l.b16 %v107
  %v259 = vunpack.c.l.b16 %v108
  %v260 = vunpack.c.l.b16 %v109
  %v261 = vunpack.c.l.b16 %v110
  %v262 = vunpack.c.l.b16 %v111
  %v263 = vunpack.c.l.b16 %v112
  %v264 = vunpack.c.l.b16 %v113
  %v265 = vunpack.c.l.b16 %v114
  %v266 = vunpack.c.l.b16 %v115
  %v267 = vunpack.c.l.b16 %v116
  %v268 = vpack.c.b16 %v209, %v208
  %v269 = vpack.c.b16 %v211, %v210
  %v270 = vpack.c.b16 %v213, %v212
  %v271 = vpack.c.b16 %v215, %v214
  %v272 = vpack.c.b16 %v217, %v216
  %v273 = vpack.c.b16 %v219, %v218
  %v274 = vpack.c.b16 %v221, %v220
  %v275 = vpack.c.b16 %v223, %v222
  %v276 = vpack.c.b16 %v225, %v224
  %v277 = vpack.c.b16 %v227, %v226
  %v278 = vpack.c.b16 %v229, %v228
  %v279 = vpack.c.b16 %v231, %v230
  %v280 = vpack.c.b16 %v233, %v232
  %v281 = vpack.c.b16 %v235, %v234
  %v282 = vpack.c.b16 %v237, %v236
  %v283 = vpack.c.b16 %v239, %v238
  %v284 = vpack.c.b16 %v241, %v240
  %v285 = vpack.c.b16 %v243, %v242
  %v286 = vpack.c.b16 %v245, %v244
  %v287 = vpack.c.b16 %v247, %v246
  %v288 = vpack.c.b16 %v249, %v248
  %v289 = vpack.c.b16 %v251, %v250
  %v290 = vpack.c.b16 %v253, %v252
  %v291 = vpack.c.b16 %v255, %v254
  %v292 = vpack.c.b16 %v257, %v256
  %v293 = vpack.c.b16 %v259, %v258
  %v294 = vpack.c.b16 %v261, %v260
  %v295 = vpack.c.b16 %v263, %v262
  %v296 = vpack.c.b16 %v265, %v264
  %v297 = vpack.c.b16 %v267, %v266
  %vm328 = vcmask 785408
  %v330 = vsel %vm328, %v144, 0
  %332 = vmatprep.subr.bf16.mxu0 0
  %333 = vmatpush1.bf16.msra.mxu0 %v268
  %334 = vmatprep.subr.bf16.mxu0 0
  %335 = vmatpush1.bf16.msra.mxu0 %v269
  %336 = vmatprep.subr.bf16.mxu0 0
  %337 = vmatpush1.bf16.msra.mxu0 %v270
  %338 = vmatprep.subr.bf16.mxu0 0
  %339 = vmatpush1.bf16.msra.mxu0 %v271
  %340 = vmatprep.subr.bf16.mxu0 0
  %341 = vmatpush1.bf16.msra.mxu0 %v272
  %342 = vmatprep.subr.bf16.mxu0 0
  %343 = vmatpush1.bf16.msra.mxu0 %v273
  %344 = vmatprep.subr.bf16.mxu0 0
  %345 = vmatpush1.bf16.msra.mxu0 %v274
  %346 = vmatprep.subr.bf16.mxu0 0
  %347 = vmatpush1.bf16.msra.mxu0 %v275
  %348 = vmatprep.subr.bf16.mxu0 0
  %349 = vmatpush1.bf16.msra.mxu0 %v276
  %350 = vmatprep.subr.bf16.mxu0 0
  %351 = vmatpush1.bf16.msra.mxu0 %v277
  %352 = vmatprep.subr.bf16.mxu0 0
  %353 = vmatpush1.bf16.msra.mxu0 %v278
  %354 = vmatprep.subr.bf16.mxu0 0
  %355 = vmatpush1.bf16.msra.mxu0 %v279
  %356 = vmatprep.subr.bf16.mxu0 0
  %357 = vmatpush1.bf16.msra.mxu0 %v280
  %358 = vmatprep.subr.bf16.mxu0 0
  %359 = vmatpush1.bf16.msra.mxu0 %v281
  %360 = vmatprep.subr.bf16.mxu0 0
  %361 = vmatpush1.bf16.msra.mxu0 %v282
  %362 = vmatprep.subr.bf16.mxu0 0
  %363 = vmatpush1.bf16.msra.mxu0 %v283
  %364 = vmatprep.mubr.bf16.mxu0 %v142
  %365 = vmatmul.mubr.bf16.gmra.mrb[0].mxu0 %v141
  %v366 = vpop.f32.mrb[0].mxu0
  %v367 = vadd.f32 %v122, %v366
  %v368 = vpop.f32.mrb[0].mxu0
  %v369 = vpop.f32.mrb[0].mxu0
  %v370 = vadd.f32 %v127, %v369
  %v371 = vpop.f32.mrb[0].mxu0
  %372 = vdwg.mxu0
  %373 = vmatprep.subr.bf16.mxu0 0
  %374 = vmatpush1.bf16.msra.mxu0 %v284
  %375 = vmatprep.subr.bf16.mxu0 0
  %376 = vmatpush1.bf16.msra.mxu0 %v285
  %377 = vmatprep.subr.bf16.mxu0 0
  %378 = vmatpush1.bf16.msra.mxu0 %v286
  %379 = vmatprep.subr.bf16.mxu0 0
  %380 = vmatpush1.bf16.msra.mxu0 %v287
  %381 = vmatprep.subr.bf16.mxu0 0
  %382 = vmatpush1.bf16.msra.mxu0 %v288
  %383 = vmatprep.subr.bf16.mxu0 0
  %384 = vmatpush1.bf16.msra.mxu0 %v289
  %385 = vmatprep.subr.bf16.mxu0 0
  %386 = vmatpush1.bf16.msra.mxu0 %v290
  %387 = vmatprep.subr.bf16.mxu0 0
  %388 = vmatpush1.bf16.msra.mxu0 %v291
  %389 = vmatprep.subr.bf16.mxu0 0
  %390 = vmatpush1.bf16.msra.mxu0 %v292
  %391 = vmatprep.subr.bf16.mxu0 0
  %392 = vmatpush1.bf16.msra.mxu0 %v293
  %393 = vmatprep.subr.bf16.mxu0 0
  %394 = vmatpush1.bf16.msra.mxu0 %v294
  %395 = vmatprep.subr.bf16.mxu0 0
  %396 = vmatpush1.bf16.msra.mxu0 %v295
  %397 = vmatprep.subr.bf16.mxu0 0
  %398 = vmatpush1.bf16.msra.mxu0 %v296
  %399 = vmatprep.subr.bf16.mxu0 0
  %400 = vmatpush1.bf16.msra.mxu0 %v297
  %401 = vmatprep.subr.bf16.mxu0 0
  %402 = vmatpush1.bf16.msra.mxu0 0
  %403 = vmatprep.subr.bf16.mxu0 0
  %404 = vmatpush1.bf16.msra.mxu0 0
  %405 = vmatprep.mubr.bf16.mxu0 %v330
  %406 = vmatmul.mubr.bf16.gmra.mrb[0].mxu0 %v143
  %v407 = vpop.f32.mrb[0].mxu0
  %v408 = vadd.f32 %v367, %v407
  %v409 = vpop.f32.mrb[0].mxu0
  %v410 = vpop.f32.mrb[0].mxu0
  %v411 = vadd.f32 %v370, %v410
  %v412 = vpop.f32.mrb[0].mxu0
  %413 = vdwg.mxu0
  %414 = vadd.xlane.f32.xlu0 %v408
  %v415 = vpop.xlane.xlu0 %414
  %416 = vadd.xlane.f32.xlu0 %v411
  %v417 = vpop.xlane.xlu0 %416
  %v418 = vmul.f32 %v415, 0.0078125
  %v419 = vmul.f32 %v417, 0.0078125
  %v420 = vmul.f32 %v408, %v408
  %v421 = vmul.f32 %v411, %v411
  %422 = vadd.xlane.f32.xlu0 %v420
  %v423 = vpop.xlane.xlu0 %422
  %424 = vadd.xlane.f32.xlu0 %v421
  %v425 = vpop.xlane.xlu0 %424
  %v426 = vmul.f32 %v423, 0.0078125
  %v427 = vmul.f32 %v425, 0.0078125
  %v428 = vmul.f32 %v418, %v418
  %v429 = vmul.f32 %v419, %v419
  %v430 = vsub.f32 %v426, %v428
  %v431 = vsub.f32 %v427, %v429
  %v432 = vld [vmem:[%s3] sm:$0xff]
  %v433 = vld [vmem:[%s3 + $0x8] sm:$0xff]
  %v434 = vadd.f32 %v430, 1e-05
  %v435 = vadd.f32 %v431, 1e-05
  %v436 = vrsqrt.pop %v434
  %v437 = vrsqrt.pop %v435
  %v438 = vmul.f32 %v432, %v436
  %v439 = vmul.f32 %v433, %v437
  %v440 = vld [vmem:[%s4] sm:$0xff]
  %v441 = vld [vmem:[%s4 + $0x8] sm:$0xff]
  %v442 = vmul.f32 %v418, %v438
  %v443 = vmul.f32 %v419, %v439
  %v444 = vsub.f32 %v440, %v442
  %v445 = vsub.f32 %v441, %v443
  %447 = vset.pattern.permute.xlu0 0
  %448 = vperm.xlu0 %447, %v438
  %v449 = vpop.permute.xlu0 %448
  %452 = vset.pattern.permute.xlu0 0
  %453 = vperm.xlu0 %452, %v439
  %v454 = vpop.permute.xlu0 %453
  %v456 = vmul.f32 %v408, %v449
  %v457 = vmul.f32 %v411, %v454
  %459 = vset.pattern.permute.xlu0 0
  %460 = vperm.xlu0 %459, %v444
  %v461 = vpop.permute.xlu0 %460
  %464 = vset.pattern.permute.xlu0 0
  %465 = vperm.xlu0 %464, %v445
  %v466 = vpop.permute.xlu0 %465
  %v468 = vadd.f32 %v456, %v461
  %v469 = vadd.f32 %v457, %v466
  %v470 = vmax.f32 %v468, 0.0
  %v471 = vmax.f32 %v469, 0.0
  %474 = vrot.lane.b32.xlu0 %v470, 127
  %v475 = vpop.permute.xlu0 %474
  %476 = vrot.lane.b32.xlu0 %v471, 127
  %v477 = vpop.permute.xlu0 %476
  %480 = vrot.lane.b32.xlu0 %v470, 126
  %v481 = vpop.permute.xlu0 %480
  %482 = vrot.lane.b32.xlu0 %v471, 126
  %v483 = vpop.permute.xlu0 %482
  %486 = vrot.lane.b32.xlu0 %v470, 125
  %v487 = vpop.permute.xlu0 %486
  %488 = vrot.lane.b32.xlu0 %v471, 125
  %v489 = vpop.permute.xlu0 %488
  %v492 = vld [vmem:[%s5] sm:$0xff]
  %v493 = vld [vmem:[%s5 + $0x8] sm:$0xff]
  %v494 = vld [vmem:[%s6] sm:$0xff]
  %v495 = vld [vmem:[%s6 + $0x8] sm:$0xff]
  %497 = vset.pattern.permute.xlu0 0
  %498 = vperm.xlu0 %497, %v494
  %v499 = vpop.permute.xlu0 %498
  %502 = vset.pattern.permute.xlu0 0
  %503 = vperm.xlu0 %502, %v495
  %v504 = vpop.permute.xlu0 %503
  %vm506 = vcmask 523264
  %v508 = vsel %vm506, %v492, 0
  %v511 = vsel %vm506, %v493, 0
  %513 = vmatprep.subr.mxu0 0.0
  %514 = vmatpush1.msra.mxu0 %v470
  %515 = vmatprep.subr.mxu0 0.0
  %516 = vmatpush1.msra.mxu0 %v471
  %517 = vmatprep.subr.mxu0 0.0
  %518 = vmatpush1.msra.mxu0 %v475
  %519 = vmatprep.subr.mxu0 0.0
  %520 = vmatpush1.msra.mxu0 %v477
  %521 = vmatprep.subr.mxu0 0.0
  %522 = vmatpush1.msra.mxu0 %v481
  %523 = vmatprep.subr.mxu0 0.0
  %524 = vmatpush1.msra.mxu0 %v483
  %525 = vmatprep.subr.mxu0 0.0
  %526 = vmatpush1.msra.mxu0 %v487
  %527 = vmatprep.subr.mxu0 0.0
  %528 = vmatpush1.msra.mxu0 %v489
  %529 = vmatprep.subr.mxu0 0.0
  %530 = vmatpush1.msra.mxu0 0.0
  %531 = vmatprep.subr.mxu0 0.0
  %532 = vmatpush1.msra.mxu0 0.0
  %533 = vmatprep.subr.mxu0 0.0
  %534 = vmatpush1.msra.mxu0 0.0
  %535 = vmatprep.subr.mxu0 0.0
  %536 = vmatpush1.msra.mxu0 0.0
  %537 = vmatprep.subr.mxu0 0.0
  %538 = vmatpush1.msra.mxu0 0.0
  %539 = vmatprep.subr.mxu0 0.0
  %540 = vmatpush1.msra.mxu0 0.0
  %541 = vmatprep.subr.mxu0 0.0
  %542 = vmatpush1.msra.mxu0 0.0
  %543 = vmatprep.subr.mxu0 0.0
  %544 = vmatpush1.msra.mxu0 0.0
  %545 = vmatprep.subr.mxu0 0.0
  %546 = vmatpush1.msra.mxu0 0.0
  %547 = vmatprep.subr.mxu0 0.0
  %548 = vmatpush1.msra.mxu0 0.0
  %549 = vmatprep.subr.mxu0 0.0
  %550 = vmatpush1.msra.mxu0 0.0
  %551 = vmatprep.subr.mxu0 0.0
  %552 = vmatpush1.msra.mxu0 0.0
  %553 = vmatprep.subr.mxu0 0.0
  %554 = vmatpush1.msra.mxu0 0.0
  %555 = vmatprep.subr.mxu0 0.0
  %556 = vmatpush1.msra.mxu0 0.0
  %557 = vmatprep.subr.mxu0 0.0
  %558 = vmatpush1.msra.mxu0 0.0
  %559 = vmatprep.subr.mxu0 0.0
  %560 = vmatpush1.msra.mxu0 0.0
  %561 = vmatprep.subr.mxu0 0.0
  %562 = vmatpush1.msra.mxu0 0.0
  %563 = vmatprep.subr.mxu0 0.0
  %564 = vmatpush1.msra.mxu0 0.0
  %565 = vmatprep.subr.mxu0 0.0
  %566 = vmatpush1.msra.mxu0 0.0
  %567 = vmatprep.subr.mxu0 0.0
  %568 = vmatpush1.msra.mxu0 0.0
  %569 = vmatprep.subr.mxu0 0.0
  %570 = vmatpush1.msra.mxu0 0.0
  %571 = vmatprep.subr.mxu0 0.0
  %572 = vmatpush1.msra.mxu0 0.0
  %573 = vmatprep.subr.mxu0 0.0
  %574 = vmatpush1.msra.mxu0 0.0
  %575 = vmatprep.subr.mxu0 0.0
  %576 = vmatpush1.msra.mxu0 0.0
  %577 = vmatprep.mubr.f32.mxu0 0.0
  %578 = vmatmul.mubr.f32.gmra.mrb[0].mxu0 %v508
  %v579 = vpop.f32.mrb[0].mxu0
  %v580 = vadd.f32 %v499, %v579
  %v581 = vpop.f32.mrb[0].mxu0
  %582 = vmatprep.mubr.f32.mxu0 0.0
  %583 = vmatmul.mubr.f32.gmra.mrb[0].mxu0 %v511
  %v584 = vpop.f32.mrb[0].mxu0
  %v585 = vadd.f32 %v504, %v584
  %v586 = vpop.f32.mrb[0].mxu0
  %587 = vdwg.mxu0
  %v588 = vlaneseq
  %v589 = vand.u32 %v588, 127
  %v590 = vand.u32 %v589, 31
  %vm591 = vcmp.lt.s32.totalorder %v590, 29
  %v592 = vsel %vm591, 1, 0
  %vm593 = vcmp.eq.s32.totalorder %v592, 1
  %v594 = vsel %vm593, %v580, 0.0
  %v595 = vsel %vm593, %v585, 0.0
  %596 = vadd.xlane.f32.xlu0 %v594
  %v597 = vpop.xlane.xlu0 %596
  %598 = vadd.xlane.f32.xlu0 %v595
  %v599 = vpop.xlane.xlu0 %598
  %v600 = vmul.f32 %v597, 0.00862069
  %v601 = vmul.f32 %v599, 0.00862069
  %v602 = vmul.f32 %v594, %v594
  %v603 = vmul.f32 %v595, %v595
  %604 = vadd.xlane.f32.xlu0 %v602
  %v605 = vpop.xlane.xlu0 %604
  %606 = vadd.xlane.f32.xlu0 %v603
  %v607 = vpop.xlane.xlu0 %606
  %v608 = vmul.f32 %v605, 0.00862069
  %v609 = vmul.f32 %v607, 0.00862069
  %v610 = vmul.f32 %v600, %v600
  %v611 = vmul.f32 %v601, %v601
  %v612 = vsub.f32 %v608, %v610
  %v613 = vsub.f32 %v609, %v611
  %v614 = vld [vmem:[%s7] sm:$0xff]
  %v615 = vld [vmem:[%s7 + $0x8] sm:$0xff]
  %v616 = vadd.f32 %v612, 1e-05
  %v617 = vadd.f32 %v613, 1e-05
  %v618 = vrsqrt.pop %v616
  %v619 = vrsqrt.pop %v617
  %v620 = vmul.f32 %v614, %v618
  %v621 = vmul.f32 %v615, %v619
  %v622 = vld [vmem:[%s8] sm:$0xff]
  %v623 = vld [vmem:[%s8 + $0x8] sm:$0xff]
  %v624 = vmul.f32 %v600, %v620
  %v625 = vmul.f32 %v601, %v621
  %v626 = vsub.f32 %v622, %v624
  %v627 = vsub.f32 %v623, %v625
  %629 = vset.pattern.permute.xlu0 0
  %630 = vperm.xlu0 %629, %v620
  %v631 = vpop.permute.xlu0 %630
  %634 = vset.pattern.permute.xlu0 0
  %635 = vperm.xlu0 %634, %v621
  %v636 = vpop.permute.xlu0 %635
  %v638 = vmul.f32 %v580, %v631
  %v639 = vmul.f32 %v585, %v636
  %641 = vset.pattern.permute.xlu0 0
  %642 = vperm.xlu0 %641, %v626
  %v643 = vpop.permute.xlu0 %642
  %646 = vset.pattern.permute.xlu0 0
  %647 = vperm.xlu0 %646, %v627
  %v648 = vpop.permute.xlu0 %647
  %v650 = vadd.f32 %v638, %v643
  %v651 = vadd.f32 %v639, %v648
  %v652 = vmax.f32 %v650, 0.0
  %v653 = vmax.f32 %v651, 0.0
  %654 = vst [vmem:[#allocation2] sm:$0xff] 0.0
  %655 = vst [vmem:[#allocation2 + $0x8] sm:$0xff] 0.0
  %vm656 = vcmask 253952
  %657 = vst.msk [vmem:[#allocation2] sm:$0x1] %vm656, %v652
  %v659 = vrot.slane %v652, 5
  %v660 = vrot.slane %v659, 4
  %661 = vrot.lane.b32.xlu0 %v660, 32
  %v662 = vpop.permute.xlu0 %661
  %vm664 = vcmask 516352
  %665 = vst.msk [vmem:[#allocation2] sm:$0x1] %vm664, %v662
  %v666 = vrot.slane %v652, 6
  %v667 = vrot.slane %v666, 4
  %668 = vrot.lane.b32.xlu0 %v667, 64
  %v669 = vpop.permute.xlu0 %668
  %vm671 = vcmask 778752
  %672 = vst.msk [vmem:[#allocation2] sm:$0x1] %vm671, %v669
  %v673 = vrot.slane %v652, 7
  %v674 = vrot.slane %v673, 4
  %675 = vrot.lane.b32.xlu0 %v674, 96
  %v676 = vpop.permute.xlu0 %675
  %vm678 = vcmask 1041152
  %679 = vst.msk [vmem:[#allocation2] sm:$0x1] %vm678, %v676
  %v680 = vcombine.high %v652, %v652
  %682 = vst.msk [vmem:[#allocation2 + $0x4] sm:$0x1] %vm656, %v680
  %v683 = vrot.slane %v680, 5
  %v684 = vrot.slane %v683, 4
  %685 = vrot.lane.b32.xlu0 %v684, 32
  %v686 = vpop.permute.xlu0 %685
  %688 = vst.msk [vmem:[#allocation2 + $0x4] sm:$0x1] %vm664, %v686
  %v689 = vrot.slane %v680, 6
  %v690 = vrot.slane %v689, 4
  %691 = vrot.lane.b32.xlu0 %v690, 64
  %v692 = vpop.permute.xlu0 %691
  %694 = vst.msk [vmem:[#allocation2 + $0x4] sm:$0x1] %vm671, %v692
  %v695 = vrot.slane %v680, 7
  %v696 = vrot.slane %v695, 4
  %697 = vrot.lane.b32.xlu0 %v696, 96
  %v698 = vpop.permute.xlu0 %697
  %700 = vst.msk [vmem:[#allocation2 + $0x4] sm:$0x1] %vm678, %v698
  %701 = vst.msk [vmem:[#allocation2 + $0x8] sm:$0x1] %vm656, %v653
  %702 = vrot.lane.b32.xlu0 %v652, 96
  %v703 = vpop.permute.xlu0 %702
  %705 = vst.msk [vmem:[#allocation2 + $0x1] sm:$0x1] %vm656, %v703
  %707 = vst.msk [vmem:[#allocation2 + $0x1] sm:$0x1] %vm664, %v660
  %708 = vrot.lane.b32.xlu0 %v667, 32
  %v709 = vpop.permute.xlu0 %708
  %711 = vst.msk [vmem:[#allocation2 + $0x1] sm:$0x1] %vm671, %v709
  %712 = vrot.lane.b32.xlu0 %v674, 64
  %v713 = vpop.permute.xlu0 %712
  %715 = vst.msk [vmem:[#allocation2 + $0x1] sm:$0x1] %vm678, %v713
  %716 = vrot.lane.b32.xlu0 %v680, 96
  %v717 = vpop.permute.xlu0 %716
  %719 = vst.msk [vmem:[#allocation2 + $0x5] sm:$0x1] %vm656, %v717
  %721 = vst.msk [vmem:[#allocation2 + $0x5] sm:$0x1] %vm664, %v684
  %722 = vrot.lane.b32.xlu0 %v690, 32
  %v723 = vpop.permute.xlu0 %722
  %725 = vst.msk [vmem:[#allocation2 + $0x5] sm:$0x1] %vm671, %v723
  %726 = vrot.lane.b32.xlu0 %v696, 64
  %v727 = vpop.permute.xlu0 %726
  %729 = vst.msk [vmem:[#allocation2 + $0x5] sm:$0x1] %vm678, %v727
  %731 = vrot.lane.b32.xlu0 %v653, 96
  %v732 = vpop.permute.xlu0 %731
  %734 = vst.msk [vmem:[#allocation2 + $0x9] sm:$0x1] %vm656, %v732
  %735 = vrot.lane.b32.xlu0 %v652, 64
  %v736 = vpop.permute.xlu0 %735
  %738 = vst.msk [vmem:[#allocation2 + $0x2] sm:$0x1] %vm656, %v736
  %739 = vrot.lane.b32.xlu0 %v660, 96
  %v740 = vpop.permute.xlu0 %739
  %742 = vst.msk [vmem:[#allocation2 + $0x2] sm:$0x1] %vm664, %v740
  %744 = vst.msk [vmem:[#allocation2 + $0x2] sm:$0x1] %vm671, %v667
  %745 = vrot.lane.b32.xlu0 %v674, 32
  %v746 = vpop.permute.xlu0 %745
  %748 = vst.msk [vmem:[#allocation2 + $0x2] sm:$0x1] %vm678, %v746
  %749 = vrot.lane.b32.xlu0 %v680, 64
  %v750 = vpop.permute.xlu0 %749
  %752 = vst.msk [vmem:[#allocation2 + $0x6] sm:$0x1] %vm656, %v750
  %753 = vrot.lane.b32.xlu0 %v684, 96
  %v754 = vpop.permute.xlu0 %753
  %756 = vst.msk [vmem:[#allocation2 + $0x6] sm:$0x1] %vm664, %v754
  %758 = vst.msk [vmem:[#allocation2 + $0x6] sm:$0x1] %vm671, %v690
  %759 = vrot.lane.b32.xlu0 %v696, 32
  %v760 = vpop.permute.xlu0 %759
  %762 = vst.msk [vmem:[#allocation2 + $0x6] sm:$0x1] %vm678, %v760
  %763 = vrot.lane.b32.xlu0 %v653, 64
  %v764 = vpop.permute.xlu0 %763
  %766 = vst.msk [vmem:[#allocation2 + $0xa] sm:$0x1] %vm656, %v764
  %767 = vrot.lane.b32.xlu0 %v652, 32
  %v768 = vpop.permute.xlu0 %767
  %770 = vst.msk [vmem:[#allocation2 + $0x3] sm:$0x1] %vm656, %v768
  %771 = vrot.lane.b32.xlu0 %v660, 64
  %v772 = vpop.permute.xlu0 %771
  %774 = vst.msk [vmem:[#allocation2 + $0x3] sm:$0x1] %vm664, %v772
  %775 = vrot.lane.b32.xlu0 %v667, 96
  %v776 = vpop.permute.xlu0 %775
  %778 = vst.msk [vmem:[#allocation2 + $0x3] sm:$0x1] %vm671, %v776
  %780 = vst.msk [vmem:[#allocation2 + $0x3] sm:$0x1] %vm678, %v674
  %781 = vrot.lane.b32.xlu0 %v680, 32
  %v782 = vpop.permute.xlu0 %781
  %784 = vst.msk [vmem:[#allocation2 + $0x7] sm:$0x1] %vm656, %v782
  %785 = vrot.lane.b32.xlu0 %v684, 64
  %v786 = vpop.permute.xlu0 %785
  %788 = vst.msk [vmem:[#allocation2 + $0x7] sm:$0x1] %vm664, %v786
  %789 = vrot.lane.b32.xlu0 %v690, 96
  %v790 = vpop.permute.xlu0 %789
  %792 = vst.msk [vmem:[#allocation2 + $0x7] sm:$0x1] %vm671, %v790
  %794 = vst.msk [vmem:[#allocation2 + $0x7] sm:$0x1] %vm678, %v696
  %795 = vrot.lane.b32.xlu0 %v653, 32
  %v796 = vpop.permute.xlu0 %795
  %798 = vst.msk [vmem:[#allocation2 + $0xb] sm:$0x1] %vm656, %v796
  %v799 = vld [vmem:[#allocation2] sm:$0xff]
  %v800 = vld [vmem:[#allocation2 + $0x8] sm:$0xff]
  %v803 = vcombine.high %v799, %v799
  %v804 = vcombine.high %v800, %v800
  %v807 = vpack.c.bf16 %v799, %v799
  %v808 = vpack.c.bf16 %v803, %v803
  %v809 = vpack.c.bf16 %v800, %v800
  %v810 = vpack.c.bf16 %v804, %v804
  %v811 = vld [vmem:[%s9] sm:$0xff]
  %v812 = vld [vmem:[%s9 + $0x8] sm:$0xff]
  %v813 = vld [vmem:[%s9 + $0x10] sm:$0xff]
  %v814 = vld [vmem:[%s9 + $0x18] sm:$0xff]
  %v815 = vld [vmem:[%s9 + $0x20] sm:$0xff]
  %v816 = vld [vmem:[%s9 + $0x28] sm:$0xff]
  %v817 = vld [vmem:[%s9 + $0x30] sm:$0xff]
  %v818 = vld [vmem:[%s9 + $0x38] sm:$0xff]
  %v819 = vld [vmem:[%s9 + $0x40] sm:$0xff]
  %v820 = vld [vmem:[%s9 + $0x48] sm:$0xff]
  %v821 = vld [vmem:[%s9 + $0x50] sm:$0xff]
  %v822 = vld [vmem:[%s9 + $0x58] sm:$0xff]
  %v823 = vld [vmem:[%s9 + $0x60] sm:$0xff]
  %v824 = vld [vmem:[%s9 + $0x68] sm:$0xff]
  %v825 = vld [vmem:[%s9 + $0x70] sm:$0xff]
  %v826 = vld [vmem:[%s9 + $0x78] sm:$0xff]
  %v827 = vld [vmem:[%s9 + $0x80] sm:$0xff]
  %v828 = vld [vmem:[%s9 + $0x88] sm:$0xff]
  %v829 = vld [vmem:[%s9 + $0x90] sm:$0xff]
  %v830 = vld [vmem:[%s9 + $0x98] sm:$0xff]
  %v831 = vld [vmem:[%s9 + $0xa0] sm:$0xff]
  %v832 = vld [vmem:[%s9 + $0xa8] sm:$0xff]
  %v833 = vld [vmem:[%s9 + $0xb0] sm:$0xff]
  %v834 = vld [vmem:[%s9 + $0xb8] sm:$0xff]
  %v835 = vld [vmem:[%s9 + $0xc0] sm:$0xff]
  %v836 = vld [vmem:[%s9 + $0xc8] sm:$0xff]
  %v837 = vld [vmem:[%s9 + $0xd0] sm:$0xff]
  %v838 = vld [vmem:[%s9 + $0xd8] sm:$0xff]
  %v839 = vld [vmem:[%s9 + $0xe0] sm:$0xff]
  %v840 = vld [vmem:[%s9 + $0xe8] sm:$0xff]
  %v841 = vld [vmem:[%s9 + $0xf0] sm:$0xff]
  %v842 = vld [vmem:[%s9 + $0xf8] sm:$0xff]
  %v843 = vld [vmem:[%s9 + $0x100] sm:$0xff]
  %v844 = vld [vmem:[%s9 + $0x108] sm:$0xff]
  %v845 = vld [vmem:[%s9 + $0x110] sm:$0xff]
  %v846 = vld [vmem:[%s9 + $0x118] sm:$0xff]
  %v847 = vld [vmem:[%s9 + $0x120] sm:$0xff]
  %v848 = vld [vmem:[%s9 + $0x128] sm:$0xff]
  %v849 = vld [vmem:[%s9 + $0x130] sm:$0xff]
  %v850 = vld [vmem:[%s9 + $0x138] sm:$0xff]
  %v851 = vld [vmem:[%s9 + $0x140] sm:$0xff]
  %v852 = vld [vmem:[%s9 + $0x148] sm:$0xff]
  %v853 = vld [vmem:[%s9 + $0x150] sm:$0xff]
  %v854 = vld [vmem:[%s9 + $0x158] sm:$0xff]
  %v855 = vld [vmem:[%s9 + $0x160] sm:$0xff]
  %v856 = vld [vmem:[%s9 + $0x168] sm:$0xff]
  %v857 = vld [vmem:[%s9 + $0x170] sm:$0xff]
  %v858 = vld [vmem:[%s9 + $0x178] sm:$0xff]
  %v859 = vld [vmem:[%s9 + $0x180] sm:$0xff]
  %v860 = vld [vmem:[%s9 + $0x188] sm:$0xff]
  %v861 = vld [vmem:[%s9 + $0x190] sm:$0xff]
  %v862 = vld [vmem:[%s9 + $0x198] sm:$0xff]
  %v863 = vld [vmem:[%s9 + $0x1a0] sm:$0xff]
  %v864 = vld [vmem:[%s9 + $0x1a8] sm:$0xff]
  %v865 = vld [vmem:[%s9 + $0x1b0] sm:$0xff]
  %v866 = vld [vmem:[%s9 + $0x1b8] sm:$0xff]
  %v867 = vld [vmem:[%s9 + $0x1c0] sm:$0xff]
  %v868 = vld [vmem:[%s9 + $0x1c8] sm:$0xff]
  %v869 = vld [vmem:[%s9 + $0x1d0] sm:$0xff]
  %v870 = vld [vmem:[%s9 + $0x1d8] sm:$0xff]
  %v871 = vld [vmem:[%s9 + $0x1e0] sm:$0xff]
  %v872 = vld [vmem:[%s9 + $0x1e8] sm:$0xff]
  %v873 = vld [vmem:[%s9 + $0x1f0] sm:$0xff]
  %v874 = vld [vmem:[%s9 + $0x1f8] sm:$0xff]
  %v875 = vld [vmem:[%s9 + $0x200] sm:$0xff]
  %v876 = vld [vmem:[%s9 + $0x208] sm:$0xff]
  %v877 = vld [vmem:[%s9 + $0x210] sm:$0xff]
  %v878 = vld [vmem:[%s9 + $0x218] sm:$0xff]
  %v879 = vld [vmem:[%s9 + $0x220] sm:$0xff]
  %v880 = vld [vmem:[%s9 + $0x228] sm:$0xff]
  %v881 = vld [vmem:[%s9 + $0x230] sm:$0xff]
  %v882 = vld [vmem:[%s9 + $0x238] sm:$0xff]
  %v883 = vld [vmem:[%s9 + $0x240] sm:$0xff]
  %v884 = vld [vmem:[%s9 + $0x248] sm:$0xff]
  %v885 = vld [vmem:[%s9 + $0x250] sm:$0xff]
  %v886 = vld [vmem:[%s9 + $0x258] sm:$0xff]
  %v887 = vld [vmem:[%s9 + $0x260] sm:$0xff]
  %v888 = vld [vmem:[%s9 + $0x268] sm:$0xff]
  %v889 = vld [vmem:[%s9 + $0x270] sm:$0xff]
  %v890 = vld [vmem:[%s9 + $0x278] sm:$0xff]
  %v891 = vld [vmem:[%s9 + $0x280] sm:$0xff]
  %v892 = vld [vmem:[%s9 + $0x288] sm:$0xff]
  %v893 = vld [vmem:[%s9 + $0x290] sm:$0xff]
  %v894 = vld [vmem:[%s9 + $0x298] sm:$0xff]
  %v895 = vld [vmem:[%s9 + $0x2a0] sm:$0xff]
  %v896 = vld [vmem:[%s9 + $0x2a8] sm:$0xff]
  %v897 = vld [vmem:[%s9 + $0x2b0] sm:$0xff]
  %v898 = vld [vmem:[%s9 + $0x2b8] sm:$0xff]
  %v899 = vld [vmem:[%s9 + $0x2c0] sm:$0xff]
  %v900 = vld [vmem:[%s9 + $0x2c8] sm:$0xff]
  %v901 = vld [vmem:[%s9 + $0x2d0] sm:$0xff]
  %v902 = vld [vmem:[%s9 + $0x2d8] sm:$0xff]
  %v903 = vld [vmem:[%s9 + $0x2e0] sm:$0xff]
  %v904 = vld [vmem:[%s9 + $0x2e8] sm:$0xff]
  %v905 = vld [vmem:[%s9 + $0x2f0] sm:$0xff]
  %v906 = vld [vmem:[%s9 + $0x2f8] sm:$0xff]
  %v907 = vld [vmem:[%s9 + $0x300] sm:$0xff]
  %v908 = vld [vmem:[%s9 + $0x308] sm:$0xff]
  %v909 = vld [vmem:[%s9 + $0x310] sm:$0xff]
  %v910 = vld [vmem:[%s9 + $0x318] sm:$0xff]
  %v911 = vld [vmem:[%s9 + $0x320] sm:$0xff]
  %v912 = vld [vmem:[%s9 + $0x328] sm:$0xff]
  %v913 = vld [vmem:[%s9 + $0x330] sm:$0xff]
  %v914 = vld [vmem:[%s9 + $0x338] sm:$0xff]
  %v915 = vld [vmem:[%s9 + $0x340] sm:$0xff]
  %v916 = vld [vmem:[%s9 + $0x348] sm:$0xff]
  %v917 = vld [vmem:[%s9 + $0x350] sm:$0xff]
  %v918 = vld [vmem:[%s9 + $0x358] sm:$0xff]
  %v919 = vld [vmem:[%s9 + $0x360] sm:$0xff]
  %v920 = vld [vmem:[%s9 + $0x368] sm:$0xff]
  %v921 = vld [vmem:[%s9 + $0x370] sm:$0xff]
  %v922 = vld [vmem:[%s9 + $0x378] sm:$0xff]
  %v923 = vld [vmem:[%s9 + $0x380] sm:$0xff]
  %v924 = vld [vmem:[%s9 + $0x388] sm:$0xff]
  %v925 = vld [vmem:[%s9 + $0x390] sm:$0xff]
  %v926 = vld [vmem:[%s9 + $0x398] sm:$0xff]
  %v927 = vld [vmem:[%s9 + $0x3a0] sm:$0xff]
  %v928 = vld [vmem:[%s9 + $0x3a8] sm:$0xff]
  %v929 = vld [vmem:[%s9 + $0x3b0] sm:$0xff]
  %v930 = vld [vmem:[%s9 + $0x3b8] sm:$0xff]
  %v931 = vld [vmem:[%s9 + $0x3c0] sm:$0xff]
  %v932 = vld [vmem:[%s9 + $0x3c8] sm:$0xff]
  %v933 = vld [vmem:[%s9 + $0x3d0] sm:$0xff]
  %v934 = vld [vmem:[%s9 + $0x3d8] sm:$0xff]
  %v935 = vld [vmem:[%s9 + $0x3e0] sm:$0xff]
  %v936 = vld [vmem:[%s9 + $0x3e8] sm:$0xff]
  %v937 = vld [vmem:[%s9 + $0x3f0] sm:$0xff]
  %v938 = vld [vmem:[%s9 + $0x3f8] sm:$0xff]
  %v939 = vld [vmem:[%s10] sm:$0xf]
  %v941 = vlaneseq
  %v942 = vshrl.u32 %v941, 7
  %v943 = vsub.s32 0, %v942
  %v944 = vrot.slane %v939, %v943
  %v945 = vlaneseq
  %v946 = vshrl.u32 %v945, 7
  %v947 = vsub.s32 1, %v946
  %v948 = vrot.slane %v939, %v947
  %v949 = vlaneseq
  %v950 = vshrl.u32 %v949, 7
  %v951 = vsub.s32 2, %v950
  %v952 = vrot.slane %v939, %v951
  %v953 = vlaneseq
  %v954 = vshrl.u32 %v953, 7
  %v955 = vsub.s32 3, %v954
  %v956 = vrot.slane %v939, %v955
  %v1089 = vunpack.c.l.b16 %v811
  %v1090 = vunpack.c.h.b16 %v811
  %v1091 = vunpack.c.l.b16 %v812
  %v1092 = vunpack.c.h.b16 %v812
  %v1093 = vunpack.c.l.b16 %v813
  %v1094 = vunpack.c.h.b16 %v813
  %v1095 = vunpack.c.l.b16 %v814
  %v1096 = vunpack.c.h.b16 %v814
  %v1097 = vunpack.c.l.b16 %v815
  %v1098 = vunpack.c.h.b16 %v815
  %v1099 = vunpack.c.l.b16 %v816
  %v1100 = vunpack.c.h.b16 %v816
  %v1101 = vunpack.c.l.b16 %v817
  %v1102 = vunpack.c.h.b16 %v817
  %v1103 = vunpack.c.l.b16 %v818
  %v1104 = vunpack.c.h.b16 %v818
  %v1105 = vunpack.c.l.b16 %v819
  %v1106 = vunpack.c.h.b16 %v819
  %v1107 = vunpack.c.l.b16 %v820
  %v1108 = vunpack.c.h.b16 %v820
  %v1109 = vunpack.c.l.b16 %v821
  %v1110 = vunpack.c.h.b16 %v821
  %v1111 = vunpack.c.l.b16 %v822
  %v1112 = vunpack.c.h.b16 %v822
  %v1113 = vunpack.c.l.b16 %v823
  %v1114 = vunpack.c.h.b16 %v823
  %v1115 = vunpack.c.l.b16 %v824
  %v1116 = vunpack.c.h.b16 %v824
  %v1117 = vunpack.c.l.b16 %v825
  %v1118 = vunpack.c.h.b16 %v825
  %v1119 = vunpack.c.l.b16 %v826
  %v1120 = vunpack.c.h.b16 %v826
  %v1121 = vunpack.c.l.b16 %v827
  %v1122 = vunpack.c.h.b16 %v827
  %v1123 = vunpack.c.l.b16 %v828
  %v1124 = vunpack.c.h.b16 %v828
  %v1125 = vunpack.c.l.b16 %v829
  %v1126 = vunpack.c.h.b16 %v829
  %v1127 = vunpack.c.l.b16 %v830
  %v1128 = vunpack.c.h.b16 %v830
  %v1129 = vunpack.c.l.b16 %v831
  %v1130 = vunpack.c.h.b16 %v831
  %v1131 = vunpack.c.l.b16 %v832
  %v1132 = vunpack.c.h.b16 %v832
  %v1133 = vunpack.c.l.b16 %v833
  %v1134 = vunpack.c.h.b16 %v833
  %v1135 = vunpack.c.l.b16 %v834
  %v1136 = vunpack.c.h.b16 %v834
  %v1137 = vunpack.c.l.b16 %v835
  %v1138 = vunpack.c.h.b16 %v835
  %v1139 = vunpack.c.l.b16 %v836
  %v1140 = vunpack.c.h.b16 %v836
  %v1141 = vunpack.c.l.b16 %v837
  %v1142 = vunpack.c.h.b16 %v837
  %v1143 = vunpack.c.l.b16 %v838
  %v1144 = vunpack.c.h.b16 %v838
  %v1145 = vunpack.c.l.b16 %v839
  %v1146 = vunpack.c.h.b16 %v839
  %v1147 = vunpack.c.l.b16 %v840
  %v1148 = vunpack.c.h.b16 %v840
  %v1149 = vunpack.c.l.b16 %v841
  %v1150 = vunpack.c.h.b16 %v841
  %v1151 = vunpack.c.l.b16 %v842
  %v1152 = vunpack.c.h.b16 %v842
  %v1153 = vunpack.c.l.b16 %v843
  %v1154 = vunpack.c.h.b16 %v843
  %v1155 = vunpack.c.l.b16 %v844
  %v1156 = vunpack.c.h.b16 %v844
  %v1157 = vunpack.c.l.b16 %v845
  %v1158 = vunpack.c.h.b16 %v845
  %v1159 = vunpack.c.l.b16 %v846
  %v1160 = vunpack.c.h.b16 %v846
  %v1161 = vunpack.c.l.b16 %v847
  %v1162 = vunpack.c.h.b16 %v847
  %v1163 = vunpack.c.l.b16 %v848
  %v1164 = vunpack.c.h.b16 %v848
  %v1165 = vunpack.c.l.b16 %v849
  %v1166 = vunpack.c.h.b16 %v849
  %v1167 = vunpack.c.l.b16 %v850
  %v1168 = vunpack.c.h.b16 %v850
  %v1169 = vunpack.c.l.b16 %v851
  %v1170 = vunpack.c.h.b16 %v851
  %v1171 = vunpack.c.l.b16 %v852
  %v1172 = vunpack.c.h.b16 %v852
  %v1173 = vunpack.c.l.b16 %v853
  %v1174 = vunpack.c.h.b16 %v853
  %v1175 = vunpack.c.l.b16 %v854
  %v1176 = vunpack.c.h.b16 %v854
  %v1177 = vunpack.c.l.b16 %v855
  %v1178 = vunpack.c.h.b16 %v855
  %v1179 = vunpack.c.l.b16 %v856
  %v1180 = vunpack.c.h.b16 %v856
  %v1181 = vunpack.c.l.b16 %v857
  %v1182 = vunpack.c.h.b16 %v857
  %v1183 = vunpack.c.l.b16 %v858
  %v1184 = vunpack.c.h.b16 %v858
  %v1185 = vunpack.c.l.b16 %v859
  %v1186 = vunpack.c.h.b16 %v859
  %v1187 = vunpack.c.l.b16 %v860
  %v1188 = vunpack.c.h.b16 %v860
  %v1189 = vunpack.c.l.b16 %v861
  %v1190 = vunpack.c.h.b16 %v861
  %v1191 = vunpack.c.l.b16 %v862
  %v1192 = vunpack.c.h.b16 %v862
  %v1193 = vunpack.c.l.b16 %v863
  %v1194 = vunpack.c.h.b16 %v863
  %v1195 = vunpack.c.l.b16 %v864
  %v1196 = vunpack.c.h.b16 %v864
  %v1197 = vunpack.c.l.b16 %v865
  %v1198 = vunpack.c.h.b16 %v865
  %v1199 = vunpack.c.l.b16 %v866
  %v1200 = vunpack.c.h.b16 %v866
  %v1201 = vunpack.c.l.b16 %v867
  %v1202 = vunpack.c.h.b16 %v867
  %v1203 = vunpack.c.l.b16 %v868
  %v1204 = vunpack.c.h.b16 %v868
  %v1205 = vunpack.c.l.b16 %v869
  %v1206 = vunpack.c.h.b16 %v869
  %v1207 = vunpack.c.l.b16 %v870
  %v1208 = vunpack.c.h.b16 %v870
  %v1209 = vunpack.c.l.b16 %v871
  %v1210 = vunpack.c.h.b16 %v871
  %v1211 = vunpack.c.l.b16 %v872
  %v1212 = vunpack.c.h.b16 %v872
  %v1213 = vunpack.c.l.b16 %v873
  %v1214 = vunpack.c.h.b16 %v873
  %v1215 = vunpack.c.l.b16 %v874
  %v1216 = vunpack.c.h.b16 %v874
  %v1217 = vunpack.c.l.b16 %v875
  %v1218 = vunpack.c.h.b16 %v875
  %v1219 = vunpack.c.l.b16 %v876
  %v1220 = vunpack.c.h.b16 %v876
  %v1221 = vunpack.c.l.b16 %v877
  %v1222 = vunpack.c.h.b16 %v877
  %v1223 = vunpack.c.l.b16 %v878
  %v1224 = vunpack.c.h.b16 %v878
  %v1225 = vunpack.c.l.b16 %v879
  %v1226 = vunpack.c.h.b16 %v879
  %v1227 = vunpack.c.l.b16 %v880
  %v1228 = vunpack.c.h.b16 %v880
  %v1229 = vunpack.c.l.b16 %v881
  %v1230 = vunpack.c.h.b16 %v881
  %v1231 = vunpack.c.l.b16 %v882
  %v1232 = vunpack.c.h.b16 %v882
  %v1233 = vunpack.c.l.b16 %v883
  %v1234 = vunpack.c.h.b16 %v883
  %v1235 = vunpack.c.l.b16 %v884
  %v1236 = vunpack.c.h.b16 %v884
  %v1237 = vunpack.c.l.b16 %v885
  %v1238 = vunpack.c.h.b16 %v885
  %v1239 = vunpack.c.l.b16 %v886
  %v1240 = vunpack.c.h.b16 %v886
  %v1241 = vunpack.c.l.b16 %v887
  %v1242 = vunpack.c.h.b16 %v887
  %v1243 = vunpack.c.l.b16 %v888
  %v1244 = vunpack.c.h.b16 %v888
  %v1245 = vunpack.c.l.b16 %v889
  %v1246 = vunpack.c.h.b16 %v889
  %v1247 = vunpack.c.l.b16 %v890
  %v1248 = vunpack.c.h.b16 %v890
  %v1249 = vunpack.c.l.b16 %v891
  %v1250 = vunpack.c.h.b16 %v891
  %v1251 = vunpack.c.l.b16 %v892
  %v1252 = vunpack.c.h.b16 %v892
  %v1253 = vunpack.c.l.b16 %v893
  %v1254 = vunpack.c.h.b16 %v893
  %v1255 = vunpack.c.l.b16 %v894
  %v1256 = vunpack.c.h.b16 %v894
  %v1257 = vunpack.c.l.b16 %v895
  %v1258 = vunpack.c.h.b16 %v895
  %v1259 = vunpack.c.l.b16 %v896
  %v1260 = vunpack.c.h.b16 %v896
  %v1261 = vunpack.c.l.b16 %v897
  %v1262 = vunpack.c.h.b16 %v897
  %v1263 = vunpack.c.l.b16 %v898
  %v1264 = vunpack.c.h.b16 %v898
  %v1265 = vunpack.c.l.b16 %v899
  %v1266 = vunpack.c.h.b16 %v899
  %v1267 = vunpack.c.l.b16 %v900
  %v1268 = vunpack.c.h.b16 %v900
  %v1269 = vunpack.c.l.b16 %v901
  %v1270 = vunpack.c.h.b16 %v901
  %v1271 = vunpack.c.l.b16 %v902
  %v1272 = vunpack.c.h.b16 %v902
  %v1273 = vunpack.c.l.b16 %v903
  %v1274 = vunpack.c.h.b16 %v903
  %v1275 = vunpack.c.l.b16 %v904
  %v1276 = vunpack.c.h.b16 %v904
  %v1277 = vunpack.c.l.b16 %v905
  %v1278 = vunpack.c.h.b16 %v905
  %v1279 = vunpack.c.l.b16 %v906
  %v1280 = vunpack.c.h.b16 %v906
  %v1281 = vunpack.c.l.b16 %v907
  %v1282 = vunpack.c.h.b16 %v907
  %v1283 = vunpack.c.l.b16 %v908
  %v1284 = vunpack.c.h.b16 %v908
  %v1285 = vunpack.c.l.b16 %v909
  %v1286 = vunpack.c.h.b16 %v909
  %v1287 = vunpack.c.l.b16 %v910
  %v1288 = vunpack.c.h.b16 %v910
  %v1289 = vunpack.c.l.b16 %v911
  %v1290 = vunpack.c.h.b16 %v911
  %v1291 = vunpack.c.l.b16 %v912
  %v1292 = vunpack.c.h.b16 %v912
  %v1293 = vunpack.c.l.b16 %v913
  %v1294 = vunpack.c.h.b16 %v913
  %v1295 = vunpack.c.l.b16 %v914
  %v1296 = vunpack.c.h.b16 %v914
  %v1297 = vunpack.c.l.b16 %v915
  %v1298 = vunpack.c.h.b16 %v915
  %v1299 = vunpack.c.l.b16 %v916
  %v1300 = vunpack.c.h.b16 %v916
  %v1301 = vunpack.c.l.b16 %v917
  %v1302 = vunpack.c.h.b16 %v917
  %v1303 = vunpack.c.l.b16 %v918
  %v1304 = vunpack.c.h.b16 %v918
  %v1305 = vunpack.c.l.b16 %v919
  %v1306 = vunpack.c.h.b16 %v919
  %v1307 = vunpack.c.l.b16 %v920
  %v1308 = vunpack.c.h.b16 %v920
  %v1309 = vunpack.c.l.b16 %v921
  %v1310 = vunpack.c.h.b16 %v921
  %v1311 = vunpack.c.l.b16 %v922
  %v1312 = vunpack.c.h.b16 %v922
  %v1313 = vunpack.c.l.b16 %v923
  %v1314 = vunpack.c.h.b16 %v923
  %v1315 = vunpack.c.l.b16 %v924
  %v1316 = vunpack.c.h.b16 %v924
  %v1317 = vunpack.c.l.b16 %v925
  %v1318 = vunpack.c.h.b16 %v925
  %v1319 = vunpack.c.l.b16 %v926
  %v1320 = vunpack.c.h.b16 %v926
  %v1321 = vunpack.c.l.b16 %v927
  %v1322 = vunpack.c.h.b16 %v927
  %v1323 = vunpack.c.l.b16 %v928
  %v1324 = vunpack.c.h.b16 %v928
  %v1325 = vunpack.c.l.b16 %v929
  %v1326 = vunpack.c.h.b16 %v929
  %v1327 = vunpack.c.l.b16 %v930
  %v1328 = vunpack.c.h.b16 %v930
  %v1329 = vunpack.c.l.b16 %v931
  %v1330 = vunpack.c.h.b16 %v931
  %v1331 = vunpack.c.l.b16 %v932
  %v1332 = vunpack.c.h.b16 %v932
  %v1333 = vunpack.c.l.b16 %v933
  %v1334 = vunpack.c.h.b16 %v933
  %v1335 = vunpack.c.l.b16 %v934
  %v1336 = vunpack.c.h.b16 %v934
  %v1337 = vunpack.c.l.b16 %v935
  %v1338 = vunpack.c.h.b16 %v935
  %v1339 = vunpack.c.l.b16 %v936
  %v1340 = vunpack.c.h.b16 %v936
  %v1341 = vunpack.c.l.b16 %v937
  %v1342 = vunpack.c.h.b16 %v937
  %v1343 = vunpack.c.l.b16 %v938
  %v1344 = vunpack.c.h.b16 %v938
  %v1345 = vpack.c.b16 %v1093, %v1089
  %v1346 = vpack.c.b16 %v1094, %v1090
  %v1347 = vpack.c.b16 %v1095, %v1091
  %v1348 = vpack.c.b16 %v1096, %v1092
  %v1349 = vpack.c.b16 %v1101, %v1097
  %v1350 = vpack.c.b16 %v1102, %v1098
  %v1351 = vpack.c.b16 %v1103, %v1099
  %v1352 = vpack.c.b16 %v1104, %v1100
  %v1353 = vpack.c.b16 %v1109, %v1105
  %v1354 = vpack.c.b16 %v1110, %v1106
  %v1355 = vpack.c.b16 %v1111, %v1107
  %v1356 = vpack.c.b16 %v1112, %v1108
  %v1357 = vpack.c.b16 %v1117, %v1113
  %v1358 = vpack.c.b16 %v1118, %v1114
  %v1359 = vpack.c.b16 %v1119, %v1115
  %v1360 = vpack.c.b16 %v1120, %v1116
  %v1361 = vpack.c.b16 %v1125, %v1121
  %v1362 = vpack.c.b16 %v1126, %v1122
  %v1363 = vpack.c.b16 %v1127, %v1123
  %v1364 = vpack.c.b16 %v1128, %v1124
  %v1365 = vpack.c.b16 %v1133, %v1129
  %v1366 = vpack.c.b16 %v1134, %v1130
  %v1367 = vpack.c.b16 %v1135, %v1131
  %v1368 = vpack.c.b16 %v1136, %v1132
  %v1369 = vpack.c.b16 %v1141, %v1137
  %v1370 = vpack.c.b16 %v1142, %v1138
  %v1371 = vpack.c.b16 %v1143, %v1139
  %v1372 = vpack.c.b16 %v1144, %v1140
  %v1373 = vpack.c.b16 %v1149, %v1145
  %v1374 = vpack.c.b16 %v1150, %v1146
  %v1375 = vpack.c.b16 %v1151, %v1147
  %v1376 = vpack.c.b16 %v1152, %v1148
  %v1377 = vpack.c.b16 %v1157, %v1153
  %v1378 = vpack.c.b16 %v1158, %v1154
  %v1379 = vpack.c.b16 %v1159, %v1155
  %v1380 = vpack.c.b16 %v1160, %v1156
  %v1381 = vpack.c.b16 %v1165, %v1161
  %v1382 = vpack.c.b16 %v1166, %v1162
  %v1383 = vpack.c.b16 %v1167, %v1163
  %v1384 = vpack.c.b16 %v1168, %v1164
  %v1385 = vpack.c.b16 %v1173, %v1169
  %v1386 = vpack.c.b16 %v1174, %v1170
  %v1387 = vpack.c.b16 %v1175, %v1171
  %v1388 = vpack.c.b16 %v1176, %v1172
  %v1389 = vpack.c.b16 %v1181, %v1177
  %v1390 = vpack.c.b16 %v1182, %v1178
  %v1391 = vpack.c.b16 %v1183, %v1179
  %v1392 = vpack.c.b16 %v1184, %v1180
  %v1393 = vpack.c.b16 %v1189, %v1185
  %v1394 = vpack.c.b16 %v1190, %v1186
  %v1395 = vpack.c.b16 %v1191, %v1187
  %v1396 = vpack.c.b16 %v1192, %v1188
  %v1397 = vpack.c.b16 %v1197, %v1193
  %v1398 = vpack.c.b16 %v1198, %v1194
  %v1399 = vpack.c.b16 %v1199, %v1195
  %v1400 = vpack.c.b16 %v1200, %v1196
  %v1401 = vpack.c.b16 %v1205, %v1201
  %v1402 = vpack.c.b16 %v1206, %v1202
  %v1403 = vpack.c.b16 %v1207, %v1203
  %v1404 = vpack.c.b16 %v1208, %v1204
  %v1405 = vpack.c.b16 %v1213, %v1209
  %v1406 = vpack.c.b16 %v1214, %v1210
  %v1407 = vpack.c.b16 %v1215, %v1211
  %v1408 = vpack.c.b16 %v1216, %v1212
  %v1409 = vpack.c.b16 %v1221, %v1217
  %v1410 = vpack.c.b16 %v1222, %v1218
  %v1411 = vpack.c.b16 %v1223, %v1219
  %v1412 = vpack.c.b16 %v1224, %v1220
  %v1413 = vpack.c.b16 %v1229, %v1225
  %v1414 = vpack.c.b16 %v1230, %v1226
  %v1415 = vpack.c.b16 %v1231, %v1227
  %v1416 = vpack.c.b16 %v1232, %v1228
  %v1417 = vpack.c.b16 %v1237, %v1233
  %v1418 = vpack.c.b16 %v1238, %v1234
  %v1419 = vpack.c.b16 %v1239, %v1235
  %v1420 = vpack.c.b16 %v1240, %v1236
  %v1421 = vpack.c.b16 %v1245, %v1241
  %v1422 = vpack.c.b16 %v1246, %v1242
  %v1423 = vpack.c.b16 %v1247, %v1243
  %v1424 = vpack.c.b16 %v1248, %v1244
  %v1425 = vpack.c.b16 %v1253, %v1249
  %v1426 = vpack.c.b16 %v1254, %v1250
  %v1427 = vpack.c.b16 %v1255, %v1251
  %v1428 = vpack.c.b16 %v1256, %v1252
  %v1429 = vpack.c.b16 %v1261, %v1257
  %v1430 = vpack.c.b16 %v1262, %v1258
  %v1431 = vpack.c.b16 %v1263, %v1259
  %v1432 = vpack.c.b16 %v1264, %v1260
  %v1433 = vpack.c.b16 %v1269, %v1265
  %v1434 = vpack.c.b16 %v1270, %v1266
  %v1435 = vpack.c.b16 %v1271, %v1267
  %v1436 = vpack.c.b16 %v1272, %v1268
  %v1437 = vpack.c.b16 %v1277, %v1273
  %v1438 = vpack.c.b16 %v1278, %v1274
  %v1439 = vpack.c.b16 %v1279, %v1275
  %v1440 = vpack.c.b16 %v1280, %v1276
  %v1441 = vpack.c.b16 %v1285, %v1281
  %v1442 = vpack.c.b16 %v1286, %v1282
  %v1443 = vpack.c.b16 %v1287, %v1283
  %v1444 = vpack.c.b16 %v1288, %v1284
  %v1445 = vpack.c.b16 %v1293, %v1289
  %v1446 = vpack.c.b16 %v1294, %v1290
  %v1447 = vpack.c.b16 %v1295, %v1291
  %v1448 = vpack.c.b16 %v1296, %v1292
  %v1449 = vpack.c.b16 %v1301, %v1297
  %v1450 = vpack.c.b16 %v1302, %v1298
  %v1451 = vpack.c.b16 %v1303, %v1299
  %v1452 = vpack.c.b16 %v1304, %v1300
  %v1453 = vpack.c.b16 %v1309, %v1305
  %v1454 = vpack.c.b16 %v1310, %v1306
  %v1455 = vpack.c.b16 %v1311, %v1307
  %v1456 = vpack.c.b16 %v1312, %v1308
  %v1457 = vpack.c.b16 %v1317, %v1313
  %v1458 = vpack.c.b16 %v1318, %v1314
  %v1459 = vpack.c.b16 %v1319, %v1315
  %v1460 = vpack.c.b16 %v1320, %v1316
  %v1461 = vpack.c.b16 %v1325, %v1321
  %v1462 = vpack.c.b16 %v1326, %v1322
  %v1463 = vpack.c.b16 %v1327, %v1323
  %v1464 = vpack.c.b16 %v1328, %v1324
  %v1465 = vpack.c.b16 %v1333, %v1329
  %v1466 = vpack.c.b16 %v1334, %v1330
  %v1467 = vpack.c.b16 %v1335, %v1331
  %v1468 = vpack.c.b16 %v1336, %v1332
  %v1469 = vpack.c.b16 %v1341, %v1337
  %v1470 = vpack.c.b16 %v1342, %v1338
  %v1471 = vpack.c.b16 %v1343, %v1339
  %v1472 = vpack.c.b16 %v1344, %v1340
  %1601 = vmatprep.subr.bf16.mxu0 %v1346
  %1602 = vmatpush1.bf16.msra.mxu0 %v1345
  %1603 = vmatprep.subr.bf16.mxu0 %v1350
  %1604 = vmatpush1.bf16.msra.mxu0 %v1349
  %1605 = vmatprep.subr.bf16.mxu0 %v1354
  %1606 = vmatpush1.bf16.msra.mxu0 %v1353
  %1607 = vmatprep.subr.bf16.mxu0 %v1358
  %1608 = vmatpush1.bf16.msra.mxu0 %v1357
  %1609 = vmatprep.subr.bf16.mxu0 %v1362
  %1610 = vmatpush1.bf16.msra.mxu0 %v1361
  %1611 = vmatprep.subr.bf16.mxu0 %v1366
  %1612 = vmatpush1.bf16.msra.mxu0 %v1365
  %1613 = vmatprep.subr.bf16.mxu0 %v1370
  %1614 = vmatpush1.bf16.msra.mxu0 %v1369
  %1615 = vmatprep.subr.bf16.mxu0 %v1374
  %1616 = vmatpush1.bf16.msra.mxu0 %v1373
  %1617 = vmatprep.subr.bf16.mxu0 %v1378
  %1618 = vmatpush1.bf16.msra.mxu0 %v1377
  %1619 = vmatprep.subr.bf16.mxu0 %v1382
  %1620 = vmatpush1.bf16.msra.mxu0 %v1381
  %1621 = vmatprep.subr.bf16.mxu0 %v1386
  %1622 = vmatpush1.bf16.msra.mxu0 %v1385
  %1623 = vmatprep.subr.bf16.mxu0 %v1390
  %1624 = vmatpush1.bf16.msra.mxu0 %v1389
  %1625 = vmatprep.subr.bf16.mxu0 %v1394
  %1626 = vmatpush1.bf16.msra.mxu0 %v1393
  %1627 = vmatprep.subr.bf16.mxu0 %v1398
  %1628 = vmatpush1.bf16.msra.mxu0 %v1397
  %1629 = vmatprep.subr.bf16.mxu0 %v1402
  %1630 = vmatpush1.bf16.msra.mxu0 %v1401
  %1631 = vmatprep.subr.bf16.mxu0 %v1406
  %1632 = vmatpush1.bf16.msra.mxu0 %v1405
  %1633 = vmatprep.mubr.bf16.mxu0 %v808
  %1634 = vmatmul.mubr.bf16.gmra.mrb[0].mxu0 %v807
  %v1635 = vpop.f32.mrb[0].mxu0
  %v1636 = vadd.f32 %v944, %v1635
  %v1637 = vpop.f32.mrb[0].mxu0
  %v1638 = vadd.f32 %v948, %v1637
  %v1639 = vpop.f32.mrb[0].mxu0
  %v1640 = vpop.f32.mrb[0].mxu0
  %1641 = vdwg.mxu0
  %1642 = vmatprep.subr.bf16.mxu0 %v1410
  %1643 = vmatpush1.bf16.msra.mxu0 %v1409
  %1644 = vmatprep.subr.bf16.mxu0 %v1414
  %1645 = vmatpush1.bf16.msra.mxu0 %v1413
  %1646 = vmatprep.subr.bf16.mxu0 %v1418
  %1647 = vmatpush1.bf16.msra.mxu0 %v1417
  %1648 = vmatprep.subr.bf16.mxu0 %v1422
  %1649 = vmatpush1.bf16.msra.mxu0 %v1421
  %1650 = vmatprep.subr.bf16.mxu0 %v1426
  %1651 = vmatpush1.bf16.msra.mxu0 %v1425
  %1652 = vmatprep.subr.bf16.mxu0 %v1430
  %1653 = vmatpush1.bf16.msra.mxu0 %v1429
  %1654 = vmatprep.subr.bf16.mxu0 %v1434
  %1655 = vmatpush1.bf16.msra.mxu0 %v1433
  %1656 = vmatprep.subr.bf16.mxu0 %v1438
  %1657 = vmatpush1.bf16.msra.mxu0 %v1437
  %1658 = vmatprep.subr.bf16.mxu0 %v1442
  %1659 = vmatpush1.bf16.msra.mxu0 %v1441
  %1660 = vmatprep.subr.bf16.mxu0 %v1446
  %1661 = vmatpush1.bf16.msra.mxu0 %v1445
  %1662 = vmatprep.subr.bf16.mxu0 %v1450
  %1663 = vmatpush1.bf16.msra.mxu0 %v1449
  %1664 = vmatprep.subr.bf16.mxu0 %v1454
  %1665 = vmatpush1.bf16.msra.mxu0 %v1453
  %1666 = vmatprep.subr.bf16.mxu0 %v1458
  %1667 = vmatpush1.bf16.msra.mxu0 %v1457
  %1668 = vmatprep.subr.bf16.mxu0 %v1462
  %1669 = vmatpush1.bf16.msra.mxu0 %v1461
  %1670 = vmatprep.subr.bf16.mxu0 %v1466
  %1671 = vmatpush1.bf16.msra.mxu0 %v1465
  %1672 = vmatprep.subr.bf16.mxu0 %v1470
  %1673 = vmatpush1.bf16.msra.mxu0 %v1469
  %1674 = vmatprep.mubr.bf16.mxu0 %v810
  %1675 = vmatmul.mubr.bf16.gmra.mrb[0].mxu0 %v809
  %v1676 = vpop.f32.mrb[0].mxu0
  %v1677 = vadd.f32 %v1636, %v1676
  %v1678 = vpop.f32.mrb[0].mxu0
  %v1679 = vadd.f32 %v1638, %v1678
  %v1680 = vpop.f32.mrb[0].mxu0
  %v1681 = vpop.f32.mrb[0].mxu0
  %1682 = vdwg.mxu0
  %1683 = vmatprep.subr.bf16.mxu0 %v1348
  %1684 = vmatpush1.bf16.msra.mxu0 %v1347
  %1685 = vmatprep.subr.bf16.mxu0 %v1352
  %1686 = vmatpush1.bf16.msra.mxu0 %v1351
  %1687 = vmatprep.subr.bf16.mxu0 %v1356
  %1688 = vmatpush1.bf16.msra.mxu0 %v1355
  %1689 = vmatprep.subr.bf16.mxu0 %v1360
  %1690 = vmatpush1.bf16.msra.mxu0 %v1359
  %1691 = vmatprep.subr.bf16.mxu0 %v1364
  %1692 = vmatpush1.bf16.msra.mxu0 %v1363
  %1693 = vmatprep.subr.bf16.mxu0 %v1368
  %1694 = vmatpush1.bf16.msra.mxu0 %v1367
  %1695 = vmatprep.subr.bf16.mxu0 %v1372
  %1696 = vmatpush1.bf16.msra.mxu0 %v1371
  %1697 = vmatprep.subr.bf16.mxu0 %v1376
  %1698 = vmatpush1.bf16.msra.mxu0 %v1375
  %1699 = vmatprep.subr.bf16.mxu0 %v1380
  %1700 = vmatpush1.bf16.msra.mxu0 %v1379
  %1701 = vmatprep.subr.bf16.mxu0 %v1384
  %1702 = vmatpush1.bf16.msra.mxu0 %v1383
  %1703 = vmatprep.subr.bf16.mxu0 %v1388
  %1704 = vmatpush1.bf16.msra.mxu0 %v1387
  %1705 = vmatprep.subr.bf16.mxu0 %v1392
  %1706 = vmatpush1.bf16.msra.mxu0 %v1391
  %1707 = vmatprep.subr.bf16.mxu0 %v1396
  %1708 = vmatpush1.bf16.msra.mxu0 %v1395
  %1709 = vmatprep.subr.bf16.mxu0 %v1400
  %1710 = vmatpush1.bf16.msra.mxu0 %v1399
  %1711 = vmatprep.subr.bf16.mxu0 %v1404
  %1712 = vmatpush1.bf16.msra.mxu0 %v1403
  %1713 = vmatprep.subr.bf16.mxu0 %v1408
  %1714 = vmatpush1.bf16.msra.mxu0 %v1407
  %1715 = vmatprep.mubr.bf16.mxu0 %v808
  %1716 = vmatmul.mubr.bf16.gmra.mrb[0].mxu0 %v807
  %v1717 = vpop.f32.mrb[0].mxu0
  %v1718 = vadd.f32 %v952, %v1717
  %v1719 = vpop.f32.mrb[0].mxu0
  %v1720 = vadd.f32 %v956, %v1719
  %v1721 = vpop.f32.mrb[0].mxu0
  %v1722 = vpop.f32.mrb[0].mxu0
  %1723 = vdwg.mxu0
  %1724 = vmatprep.subr.bf16.mxu0 %v1412
  %1725 = vmatpush1.bf16.msra.mxu0 %v1411
  %1726 = vmatprep.subr.bf16.mxu0 %v1416
  %1727 = vmatpush1.bf16.msra.mxu0 %v1415
  %1728 = vmatprep.subr.bf16.mxu0 %v1420
  %1729 = vmatpush1.bf16.msra.mxu0 %v1419
  %1730 = vmatprep.subr.bf16.mxu0 %v1424
  %1731 = vmatpush1.bf16.msra.mxu0 %v1423
  %1732 = vmatprep.subr.bf16.mxu0 %v1428
  %1733 = vmatpush1.bf16.msra.mxu0 %v1427
  %1734 = vmatprep.subr.bf16.mxu0 %v1432
  %1735 = vmatpush1.bf16.msra.mxu0 %v1431
  %1736 = vmatprep.subr.bf16.mxu0 %v1436
  %1737 = vmatpush1.bf16.msra.mxu0 %v1435
  %1738 = vmatprep.subr.bf16.mxu0 %v1440
  %1739 = vmatpush1.bf16.msra.mxu0 %v1439
  %1740 = vmatprep.subr.bf16.mxu0 %v1444
  %1741 = vmatpush1.bf16.msra.mxu0 %v1443
  %1742 = vmatprep.subr.bf16.mxu0 %v1448
  %1743 = vmatpush1.bf16.msra.mxu0 %v1447
  %1744 = vmatprep.subr.bf16.mxu0 %v1452
  %1745 = vmatpush1.bf16.msra.mxu0 %v1451
  %1746 = vmatprep.subr.bf16.mxu0 %v1456
  %1747 = vmatpush1.bf16.msra.mxu0 %v1455
  %1748 = vmatprep.subr.bf16.mxu0 %v1460
  %1749 = vmatpush1.bf16.msra.mxu0 %v1459
  %1750 = vmatprep.subr.bf16.mxu0 %v1464
  %1751 = vmatpush1.bf16.msra.mxu0 %v1463
  %1752 = vmatprep.subr.bf16.mxu0 %v1468
  %1753 = vmatpush1.bf16.msra.mxu0 %v1467
  %1754 = vmatprep.subr.bf16.mxu0 %v1472
  %1755 = vmatpush1.bf16.msra.mxu0 %v1471
  %1756 = vmatprep.mubr.bf16.mxu0 %v810
  %1757 = vmatmul.mubr.bf16.gmra.mrb[0].mxu0 %v809
  %v1758 = vpop.f32.mrb[0].mxu0
  %v1759 = vadd.f32 %v1718, %v1758
  %v1760 = vpop.f32.mrb[0].mxu0
  %v1761 = vadd.f32 %v1720, %v1760
  %v1762 = vpop.f32.mrb[0].mxu0
  %v1763 = vpop.f32.mrb[0].mxu0
  %1764 = vdwg.mxu0
  %v1765 = vmax.f32 %v1677, 0.0
  %v1766 = vmax.f32 %v1679, 0.0
  %v1767 = vmax.f32 %v1759, 0.0
  %v1768 = vmax.f32 %v1761, 0.0
  %v1769 = vpack.c.bf16 %v1765, %v1765
  %v1770 = vpack.c.bf16 %v1766, %v1766
  %v1771 = vpack.c.bf16 %v1767, %v1767
  %v1772 = vpack.c.bf16 %v1768, %v1768
  %v1773 = vld [vmem:[%s11] sm:$0xff]
  %v1774 = vld [vmem:[%s11 + $0x8] sm:$0xff]
  %v1775 = vld [vmem:[%s11 + $0x10] sm:$0xff]
  %v1776 = vld [vmem:[%s11 + $0x18] sm:$0xff]
  %v1777 = vld [vmem:[%s11 + $0x20] sm:$0xff]
  %v1778 = vld [vmem:[%s11 + $0x28] sm:$0xff]
  %v1779 = vld [vmem:[%s11 + $0x30] sm:$0xff]
  %v1780 = vld [vmem:[%s11 + $0x38] sm:$0xff]
  %v1781 = vld [vmem:[%s11 + $0x40] sm:$0xff]
  %v1782 = vld [vmem:[%s11 + $0x48] sm:$0xff]
  %v1783 = vld [vmem:[%s11 + $0x50] sm:$0xff]
  %v1784 = vld [vmem:[%s11 + $0x58] sm:$0xff]
  %v1785 = vld [vmem:[%s11 + $0x60] sm:$0xff]
  %v1786 = vld [vmem:[%s11 + $0x68] sm:$0xff]
  %v1787 = vld [vmem:[%s11 + $0x70] sm:$0xff]
  %v1788 = vld [vmem:[%s11 + $0x78] sm:$0xff]
  %v1789 = vld [vmem:[%s11 + $0x80] sm:$0xff]
  %v1790 = vld [vmem:[%s11 + $0x88] sm:$0xff]
  %v1791 = vld [vmem:[%s11 + $0x90] sm:$0xff]
  %v1792 = vld [vmem:[%s11 + $0x98] sm:$0xff]
  %v1793 = vld [vmem:[%s11 + $0xa0] sm:$0xff]
  %v1794 = vld [vmem:[%s11 + $0xa8] sm:$0xff]
  %v1795 = vld [vmem:[%s11 + $0xb0] sm:$0xff]
  %v1796 = vld [vmem:[%s11 + $0xb8] sm:$0xff]
  %v1797 = vld [vmem:[%s11 + $0xc0] sm:$0xff]
  %v1798 = vld [vmem:[%s11 + $0xc8] sm:$0xff]
  %v1799 = vld [vmem:[%s11 + $0xd0] sm:$0xff]
  %v1800 = vld [vmem:[%s11 + $0xd8] sm:$0xff]
  %v1801 = vld [vmem:[%s11 + $0xe0] sm:$0xff]
  %v1802 = vld [vmem:[%s11 + $0xe8] sm:$0xff]
  %v1803 = vld [vmem:[%s11 + $0xf0] sm:$0xff]
  %v1804 = vld [vmem:[%s11 + $0xf8] sm:$0xff]
  %v1805 = vld [vmem:[%s11 + $0x100] sm:$0xff]
  %v1806 = vld [vmem:[%s11 + $0x108] sm:$0xff]
  %v1807 = vld [vmem:[%s11 + $0x110] sm:$0xff]
  %v1808 = vld [vmem:[%s11 + $0x118] sm:$0xff]
  %v1809 = vld [vmem:[%s11 + $0x120] sm:$0xff]
  %v1810 = vld [vmem:[%s11 + $0x128] sm:$0xff]
  %v1811 = vld [vmem:[%s11 + $0x130] sm:$0xff]
  %v1812 = vld [vmem:[%s11 + $0x138] sm:$0xff]
  %v1813 = vld [vmem:[%s11 + $0x140] sm:$0xff]
  %v1814 = vld [vmem:[%s11 + $0x148] sm:$0xff]
  %v1815 = vld [vmem:[%s11 + $0x150] sm:$0xff]
  %v1816 = vld [vmem:[%s11 + $0x158] sm:$0xff]
  %v1817 = vld [vmem:[%s11 + $0x160] sm:$0xff]
  %v1818 = vld [vmem:[%s11 + $0x168] sm:$0xff]
  %v1819 = vld [vmem:[%s11 + $0x170] sm:$0xff]
  %v1820 = vld [vmem:[%s11 + $0x178] sm:$0xff]
  %v1821 = vld [vmem:[%s11 + $0x180] sm:$0xff]
  %v1822 = vld [vmem:[%s11 + $0x188] sm:$0xff]
  %v1823 = vld [vmem:[%s11 + $0x190] sm:$0xff]
  %v1824 = vld [vmem:[%s11 + $0x198] sm:$0xff]
  %v1825 = vld [vmem:[%s11 + $0x1a0] sm:$0xff]
  %v1826 = vld [vmem:[%s11 + $0x1a8] sm:$0xff]
  %v1827 = vld [vmem:[%s11 + $0x1b0] sm:$0xff]
  %v1828 = vld [vmem:[%s11 + $0x1b8] sm:$0xff]
  %v1829 = vld [vmem:[%s11 + $0x1c0] sm:$0xff]
  %v1830 = vld [vmem:[%s11 + $0x1c8] sm:$0xff]
  %v1831 = vld [vmem:[%s11 + $0x1d0] sm:$0xff]
  %v1832 = vld [vmem:[%s11 + $0x1d8] sm:$0xff]
  %v1833 = vld [vmem:[%s11 + $0x1e0] sm:$0xff]
  %v1834 = vld [vmem:[%s11 + $0x1e8] sm:$0xff]
  %v1835 = vld [vmem:[%s11 + $0x1f0] sm:$0xff]
  %v1836 = vld [vmem:[%s11 + $0x1f8] sm:$0xff]
  %v1837 = vld [vmem:[%s12] sm:$0x3]
  %v1839 = vlaneseq
  %v1840 = vshrl.u32 %v1839, 7
  %v1841 = vsub.s32 0, %v1840
  %v1842 = vrot.slane %v1837, %v1841
  %v1843 = vlaneseq
  %v1844 = vshrl.u32 %v1843, 7
  %v1845 = vsub.s32 1, %v1844
  %v1846 = vrot.slane %v1837, %v1845
  %v1913 = vunpack.c.l.b16 %v1773
  %v1914 = vunpack.c.h.b16 %v1773
  %v1915 = vunpack.c.l.b16 %v1774
  %v1916 = vunpack.c.h.b16 %v1774
  %v1917 = vunpack.c.l.b16 %v1775
  %v1918 = vunpack.c.h.b16 %v1775
  %v1919 = vunpack.c.l.b16 %v1776
  %v1920 = vunpack.c.h.b16 %v1776
  %v1921 = vunpack.c.l.b16 %v1777
  %v1922 = vunpack.c.h.b16 %v1777
  %v1923 = vunpack.c.l.b16 %v1778
  %v1924 = vunpack.c.h.b16 %v1778
  %v1925 = vunpack.c.l.b16 %v1779
  %v1926 = vunpack.c.h.b16 %v1779
  %v1927 = vunpack.c.l.b16 %v1780
  %v1928 = vunpack.c.h.b16 %v1780
  %v1929 = vunpack.c.l.b16 %v1781
  %v1930 = vunpack.c.h.b16 %v1781
  %v1931 = vunpack.c.l.b16 %v1782
  %v1932 = vunpack.c.h.b16 %v1782
  %v1933 = vunpack.c.l.b16 %v1783
  %v1934 = vunpack.c.h.b16 %v1783
  %v1935 = vunpack.c.l.b16 %v1784
  %v1936 = vunpack.c.h.b16 %v1784
  %v1937 = vunpack.c.l.b16 %v1785
  %v1938 = vunpack.c.h.b16 %v1785
  %v1939 = vunpack.c.l.b16 %v1786
  %v1940 = vunpack.c.h.b16 %v1786
  %v1941 = vunpack.c.l.b16 %v1787
  %v1942 = vunpack.c.h.b16 %v1787
  %v1943 = vunpack.c.l.b16 %v1788
  %v1944 = vunpack.c.h.b16 %v1788
  %v1945 = vunpack.c.l.b16 %v1789
  %v1946 = vunpack.c.h.b16 %v1789
  %v1947 = vunpack.c.l.b16 %v1790
  %v1948 = vunpack.c.h.b16 %v1790
  %v1949 = vunpack.c.l.b16 %v1791
  %v1950 = vunpack.c.h.b16 %v1791
  %v1951 = vunpack.c.l.b16 %v1792
  %v1952 = vunpack.c.h.b16 %v1792
  %v1953 = vunpack.c.l.b16 %v1793
  %v1954 = vunpack.c.h.b16 %v1793
  %v1955 = vunpack.c.l.b16 %v1794
  %v1956 = vunpack.c.h.b16 %v1794
  %v1957 = vunpack.c.l.b16 %v1795
  %v1958 = vunpack.c.h.b16 %v1795
  %v1959 = vunpack.c.l.b16 %v1796
  %v1960 = vunpack.c.h.b16 %v1796
  %v1961 = vunpack.c.l.b16 %v1797
  %v1962 = vunpack.c.h.b16 %v1797
  %v1963 = vunpack.c.l.b16 %v1798
  %v1964 = vunpack.c.h.b16 %v1798
  %v1965 = vunpack.c.l.b16 %v1799
  %v1966 = vunpack.c.h.b16 %v1799
  %v1967 = vunpack.c.l.b16 %v1800
  %v1968 = vunpack.c.h.b16 %v1800
  %v1969 = vunpack.c.l.b16 %v1801
  %v1970 = vunpack.c.h.b16 %v1801
  %v1971 = vunpack.c.l.b16 %v1802
  %v1972 = vunpack.c.h.b16 %v1802
  %v1973 = vunpack.c.l.b16 %v1803
  %v1974 = vunpack.c.h.b16 %v1803
  %v1975 = vunpack.c.l.b16 %v1804
  %v1976 = vunpack.c.h.b16 %v1804
  %v1977 = vunpack.c.l.b16 %v1805
  %v1978 = vunpack.c.h.b16 %v1805
  %v1979 = vunpack.c.l.b16 %v1806
  %v1980 = vunpack.c.h.b16 %v1806
  %v1981 = vunpack.c.l.b16 %v1807
  %v1982 = vunpack.c.h.b16 %v1807
  %v1983 = vunpack.c.l.b16 %v1808
  %v1984 = vunpack.c.h.b16 %v1808
  %v1985 = vunpack.c.l.b16 %v1809
  %v1986 = vunpack.c.h.b16 %v1809
  %v1987 = vunpack.c.l.b16 %v1810
  %v1988 = vunpack.c.h.b16 %v1810
  %v1989 = vunpack.c.l.b16 %v1811
  %v1990 = vunpack.c.h.b16 %v1811
  %v1991 = vunpack.c.l.b16 %v1812
  %v1992 = vunpack.c.h.b16 %v1812
  %v1993 = vunpack.c.l.b16 %v1813
  %v1994 = vunpack.c.h.b16 %v1813
  %v1995 = vunpack.c.l.b16 %v1814
  %v1996 = vunpack.c.h.b16 %v1814
  %v1997 = vunpack.c.l.b16 %v1815
  %v1998 = vunpack.c.h.b16 %v1815
  %v1999 = vunpack.c.l.b16 %v1816
  %v2000 = vunpack.c.h.b16 %v1816
  %v2001 = vunpack.c.l.b16 %v1817
  %v2002 = vunpack.c.h.b16 %v1817
  %v2003 = vunpack.c.l.b16 %v1818
  %v2004 = vunpack.c.h.b16 %v1818
  %v2005 = vunpack.c.l.b16 %v1819
  %v2006 = vunpack.c.h.b16 %v1819
  %v2007 = vunpack.c.l.b16 %v1820
  %v2008 = vunpack.c.h.b16 %v1820
  %v2009 = vunpack.c.l.b16 %v1821
  %v2010 = vunpack.c.h.b16 %v1821
  %v2011 = vunpack.c.l.b16 %v1822
  %v2012 = vunpack.c.h.b16 %v1822
  %v2013 = vunpack.c.l.b16 %v1823
  %v2014 = vunpack.c.h.b16 %v1823
  %v2015 = vunpack.c.l.b16 %v1824
  %v2016 = vunpack.c.h.b16 %v1824
  %v2017 = vunpack.c.l.b16 %v1825
  %v2018 = vunpack.c.h.b16 %v1825
  %v2019 = vunpack.c.l.b16 %v1826
  %v2020 = vunpack.c.h.b16 %v1826
  %v2021 = vunpack.c.l.b16 %v1827
  %v2022 = vunpack.c.h.b16 %v1827
  %v2023 = vunpack.c.l.b16 %v1828
  %v2024 = vunpack.c.h.b16 %v1828
  %v2025 = vunpack.c.l.b16 %v1829
  %v2026 = vunpack.c.h.b16 %v1829
  %v2027 = vunpack.c.l.b16 %v1830
  %v2028 = vunpack.c.h.b16 %v1830
  %v2029 = vunpack.c.l.b16 %v1831
  %v2030 = vunpack.c.h.b16 %v1831
  %v2031 = vunpack.c.l.b16 %v1832
  %v2032 = vunpack.c.h.b16 %v1832
  %v2033 = vunpack.c.l.b16 %v1833
  %v2034 = vunpack.c.h.b16 %v1833
  %v2035 = vunpack.c.l.b16 %v1834
  %v2036 = vunpack.c.h.b16 %v1834
  %v2037 = vunpack.c.l.b16 %v1835
  %v2038 = vunpack.c.h.b16 %v1835
  %v2039 = vunpack.c.l.b16 %v1836
  %v2040 = vunpack.c.h.b16 %v1836
  %v2041 = vpack.c.b16 %v1915, %v1913
  %v2042 = vpack.c.b16 %v1916, %v1914
  %v2043 = vpack.c.b16 %v1919, %v1917
  %v2044 = vpack.c.b16 %v1920, %v1918
  %v2045 = vpack.c.b16 %v1923, %v1921
  %v2046 = vpack.c.b16 %v1924, %v1922
  %v2047 = vpack.c.b16 %v1927, %v1925
  %v2048 = vpack.c.b16 %v1928, %v1926
  %v2049 = vpack.c.b16 %v1931, %v1929
  %v2050 = vpack.c.b16 %v1932, %v1930
  %v2051 = vpack.c.b16 %v1935, %v1933
  %v2052 = vpack.c.b16 %v1936, %v1934
  %v2053 = vpack.c.b16 %v1939, %v1937
  %v2054 = vpack.c.b16 %v1940, %v1938
  %v2055 = vpack.c.b16 %v1943, %v1941
  %v2056 = vpack.c.b16 %v1944, %v1942
  %v2057 = vpack.c.b16 %v1947, %v1945
  %v2058 = vpack.c.b16 %v1948, %v1946
  %v2059 = vpack.c.b16 %v1951, %v1949
  %v2060 = vpack.c.b16 %v1952, %v1950
  %v2061 = vpack.c.b16 %v1955, %v1953
  %v2062 = vpack.c.b16 %v1956, %v1954
  %v2063 = vpack.c.b16 %v1959, %v1957
  %v2064 = vpack.c.b16 %v1960, %v1958
  %v2065 = vpack.c.b16 %v1963, %v1961
  %v2066 = vpack.c.b16 %v1964, %v1962
  %v2067 = vpack.c.b16 %v1967, %v1965
  %v2068 = vpack.c.b16 %v1968, %v1966
  %v2069 = vpack.c.b16 %v1971, %v1969
  %v2070 = vpack.c.b16 %v1972, %v1970
  %v2071 = vpack.c.b16 %v1975, %v1973
  %v2072 = vpack.c.b16 %v1976, %v1974
  %v2073 = vpack.c.b16 %v1979, %v1977
  %v2074 = vpack.c.b16 %v1980, %v1978
  %v2075 = vpack.c.b16 %v1983, %v1981
  %v2076 = vpack.c.b16 %v1984, %v1982
  %v2077 = vpack.c.b16 %v1987, %v1985
  %v2078 = vpack.c.b16 %v1988, %v1986
  %v2079 = vpack.c.b16 %v1991, %v1989
  %v2080 = vpack.c.b16 %v1992, %v1990
  %v2081 = vpack.c.b16 %v1995, %v1993
  %v2082 = vpack.c.b16 %v1996, %v1994
  %v2083 = vpack.c.b16 %v1999, %v1997
  %v2084 = vpack.c.b16 %v2000, %v1998
  %v2085 = vpack.c.b16 %v2003, %v2001
  %v2086 = vpack.c.b16 %v2004, %v2002
  %v2087 = vpack.c.b16 %v2007, %v2005
  %v2088 = vpack.c.b16 %v2008, %v2006
  %v2089 = vpack.c.b16 %v2011, %v2009
  %v2090 = vpack.c.b16 %v2012, %v2010
  %v2091 = vpack.c.b16 %v2015, %v2013
  %v2092 = vpack.c.b16 %v2016, %v2014
  %v2093 = vpack.c.b16 %v2019, %v2017
  %v2094 = vpack.c.b16 %v2020, %v2018
  %v2095 = vpack.c.b16 %v2023, %v2021
  %v2096 = vpack.c.b16 %v2024, %v2022
  %v2097 = vpack.c.b16 %v2027, %v2025
  %v2098 = vpack.c.b16 %v2028, %v2026
  %v2099 = vpack.c.b16 %v2031, %v2029
  %v2100 = vpack.c.b16 %v2032, %v2030
  %v2101 = vpack.c.b16 %v2035, %v2033
  %v2102 = vpack.c.b16 %v2036, %v2034
  %v2103 = vpack.c.b16 %v2039, %v2037
  %v2104 = vpack.c.b16 %v2040, %v2038
  %2169 = vmatprep.subr.bf16.mxu0 %v2042
  %2170 = vmatpush1.bf16.msra.mxu0 %v2041
  %2171 = vmatprep.subr.bf16.mxu0 %v2044
  %2172 = vmatpush1.bf16.msra.mxu0 %v2043
  %2173 = vmatprep.subr.bf16.mxu0 %v2046
  %2174 = vmatpush1.bf16.msra.mxu0 %v2045
  %2175 = vmatprep.subr.bf16.mxu0 %v2048
  %2176 = vmatpush1.bf16.msra.mxu0 %v2047
  %2177 = vmatprep.subr.bf16.mxu0 %v2050
  %2178 = vmatpush1.bf16.msra.mxu0 %v2049
  %2179 = vmatprep.subr.bf16.mxu0 %v2052
  %2180 = vmatpush1.bf16.msra.mxu0 %v2051
  %2181 = vmatprep.subr.bf16.mxu0 %v2054
  %2182 = vmatpush1.bf16.msra.mxu0 %v2053
  %2183 = vmatprep.subr.bf16.mxu0 %v2056
  %2184 = vmatpush1.bf16.msra.mxu0 %v2055
  %2185 = vmatprep.subr.bf16.mxu0 %v2058
  %2186 = vmatpush1.bf16.msra.mxu0 %v2057
  %2187 = vmatprep.subr.bf16.mxu0 %v2060
  %2188 = vmatpush1.bf16.msra.mxu0 %v2059
  %2189 = vmatprep.subr.bf16.mxu0 %v2062
  %2190 = vmatpush1.bf16.msra.mxu0 %v2061
  %2191 = vmatprep.subr.bf16.mxu0 %v2064
  %2192 = vmatpush1.bf16.msra.mxu0 %v2063
  %2193 = vmatprep.subr.bf16.mxu0 %v2066
  %2194 = vmatpush1.bf16.msra.mxu0 %v2065
  %2195 = vmatprep.subr.bf16.mxu0 %v2068
  %2196 = vmatpush1.bf16.msra.mxu0 %v2067
  %2197 = vmatprep.subr.bf16.mxu0 %v2070
  %2198 = vmatpush1.bf16.msra.mxu0 %v2069
  %2199 = vmatprep.subr.bf16.mxu0 %v2072
  %2200 = vmatpush1.bf16.msra.mxu0 %v2071
  %2201 = vmatprep.mubr.bf16.mxu0 %v1770
  %2202 = vmatmul.mubr.bf16.gmra.mrb[0].mxu0 %v1769
  %v2203 = vpop.f32.mrb[0].mxu0
  %v2204 = vadd.f32 %v1842, %v2203
  %v2205 = vpop.f32.mrb[0].mxu0
  %v2206 = vadd.f32 %v1846, %v2205
  %v2207 = vpop.f32.mrb[0].mxu0
  %v2208 = vpop.f32.mrb[0].mxu0
  %2209 = vdwg.mxu0
  %2210 = vmatprep.subr.bf16.mxu0 %v2074
  %2211 = vmatpush1.bf16.msra.mxu0 %v2073
  %2212 = vmatprep.subr.bf16.mxu0 %v2076
  %2213 = vmatpush1.bf16.msra.mxu0 %v2075
  %2214 = vmatprep.subr.bf16.mxu0 %v2078
  %2215 = vmatpush1.bf16.msra.mxu0 %v2077
  %2216 = vmatprep.subr.bf16.mxu0 %v2080
  %2217 = vmatpush1.bf16.msra.mxu0 %v2079
  %2218 = vmatprep.subr.bf16.mxu0 %v2082
  %2219 = vmatpush1.bf16.msra.mxu0 %v2081
  %2220 = vmatprep.subr.bf16.mxu0 %v2084
  %2221 = vmatpush1.bf16.msra.mxu0 %v2083
  %2222 = vmatprep.subr.bf16.mxu0 %v2086
  %2223 = vmatpush1.bf16.msra.mxu0 %v2085
  %2224 = vmatprep.subr.bf16.mxu0 %v2088
  %2225 = vmatpush1.bf16.msra.mxu0 %v2087
  %2226 = vmatprep.subr.bf16.mxu0 %v2090
  %2227 = vmatpush1.bf16.msra.mxu0 %v2089
  %2228 = vmatprep.subr.bf16.mxu0 %v2092
  %2229 = vmatpush1.bf16.msra.mxu0 %v2091
  %2230 = vmatprep.subr.bf16.mxu0 %v2094
  %2231 = vmatpush1.bf16.msra.mxu0 %v2093
  %2232 = vmatprep.subr.bf16.mxu0 %v2096
  %2233 = vmatpush1.bf16.msra.mxu0 %v2095
  %2234 = vmatprep.subr.bf16.mxu0 %v2098
  %2235 = vmatpush1.bf16.msra.mxu0 %v2097
  %2236 = vmatprep.subr.bf16.mxu0 %v2100
  %2237 = vmatpush1.bf16.msra.mxu0 %v2099
  %2238 = vmatprep.subr.bf16.mxu0 %v2102
  %2239 = vmatpush1.bf16.msra.mxu0 %v2101
  %2240 = vmatprep.subr.bf16.mxu0 %v2104
  %2241 = vmatpush1.bf16.msra.mxu0 %v2103
  %2242 = vmatprep.mubr.bf16.mxu0 %v1772
  %2243 = vmatmul.mubr.bf16.gmra.mrb[0].mxu0 %v1771
  %v2244 = vpop.f32.mrb[0].mxu0
  %v2245 = vadd.f32 %v2204, %v2244
  %v2246 = vpop.f32.mrb[0].mxu0
  %v2247 = vadd.f32 %v2206, %v2246
  %v2248 = vpop.f32.mrb[0].mxu0
  %v2249 = vpop.f32.mrb[0].mxu0
  %2250 = vdwg.mxu0
  %vm2251 = vcmp.gt.f32.partialorder %v2245, 0.0
  %vm2252 = vcmp.gt.f32.partialorder %v2247, 0.0
  %v2253 = vmul.f32 %v2245, 0.2
  %v2254 = vmul.f32 %v2247, 0.2
  %v2255 = vsel %vm2251, %v2245, %v2253
  %v2256 = vsel %vm2252, %v2247, %v2254
  %v2257 = vld [vmem:[%s13] sm:$0x3]
  %v2259 = vlaneseq
  %v2260 = vshrl.u32 %v2259, 7
  %v2261 = vsub.s32 0, %v2260
  %v2262 = vrot.slane %v2257, %v2261
  %v2263 = vlaneseq
  %v2264 = vshrl.u32 %v2263, 7
  %v2265 = vsub.s32 1, %v2264
  %v2266 = vrot.slane %v2257, %v2265
  %v2269 = vmul.f32 %v2255, %v2262
  %v2270 = vmul.f32 %v2256, %v2266
  %vm2271 = vcmask 1043456
  %v2272 = vsel %vm2271, %v2269, 0.0
  %v2273 = vsel %vm2271, %v2270, 0.0
  %v2274 = vadd.f32 %v2272, %v2273
  %2275 = vadd.xlane.f32.xlu0 %v2274
  %v2276 = vpop.xlane.xlu0 %2275
  %v2277 = vld [vmem:[#allocation3] sm:$0x1]
  %v2279 = vlaneseq
  %v2280 = vshrl.u32 %v2279, 7
  %v2281 = vsub.s32 0, %v2280
  %v2282 = vrot.slane %v2277, %v2281
  %v2284 = vadd.f32 %v2276, %v2282
  %v2285 = vxor.u32 %v2284, 2147483648
  %v2286 = vmul.f32 %v2285, 1.442695
  %v2287 = vpow.pop %v2286
  %v2288 = vadd.f32 %v2287, 1.0
  %v2289 = vrcp.pop %v2288
  %v2290 = vmul.f32 1.0, %v2289
  %vm2291 = vcmask 3072
  %2292 = vst.msk [vmem:[%s15] sm:$0xf] %vm2291, %v2290
  // Predicated region
  $region62: #{fwd.1} parent=0 // pred_check
    _
  $region63: #{fwd.1} parent=0 // pred_check_branch
    %2294 = sbr.rel (0) target = $region65
  $region64: #{fwd.1} parent=0 // pred_region
    _
  $region65: #{fwd.1} parent=0 // pred_fallthru
    _
  // Predicated region
  $region66: #{fwd.1} parent=0 // pred_check
    _
  $region67: #{fwd.1} parent=0 // pred_check_branch
    %2296 = sbr.rel (0) target = $region69
  $region68: #{fwd.1} parent=0 // pred_region
    _
  $region69: #{fwd.1} parent=0 // pred_fallthru
    _

</llo_original>
